<compile_context>
chip_gen: v7x
topology: tpu7x:2x2x1
jax: 0.10.0
libtpu: 0.0.40
codegen_flags: <defaults>
</compile_context>

<pallas_src>
import jax
import jax.numpy as jnp
from jax import lax
from jax.experimental import pallas as pl
from jax.experimental.pallas import tpu as pltpu


_MASK_FILL = -1000.0
_MASK_EPS = 1e-8


def _masked_logits(zr_ref, zct_ref, keep):
    # v = z_rows @ zT_cols on the MXU in its native K x N orientation.
    # precision=HIGHEST: free on a mem-bound kernel, closes the gap to torch.mm.
    v = lax.dot_general(
        zr_ref[...], zct_ref[...],
        dimension_numbers=(((1,), (0,)), ((), ())),
        preferred_element_type=jnp.float32,
        precision=lax.Precision.HIGHEST)
    return jnp.where(keep, v, jnp.float32(_MASK_FILL))


def _stats_kernel(zr_ref, zct_ref, mask_ref, m_ref, l_ref, keep_ref):
    """Pass 1: per-matrix-row online (max, sum_exp) + int8 keep mask."""
    kc = pl.program_id(1)
    # TODO(synk): torch's `mask < 1e-8` keeps NaN entries; `mask >= 1e-8` fills
    # them. NaN-mask behavior differs in that edge case only.
    keep = mask_ref[...] >= jnp.float32(_MASK_EPS)
    keep_ref[...] = keep.astype(jnp.int8)
    v = _masked_logits(zr_ref, zct_ref, keep)
    tile_max = jnp.max(v, axis=1, keepdims=True)          # (tr, 1)

    @pl.when(kc == 0)
    def _init():
        m_ref[...] = tile_max
        l_ref[...] = jnp.sum(jnp.exp(v - tile_max), axis=1, keepdims=True)

    @pl.when(kc != 0)
    def _update():
        m_old = m_ref[...]
        m_new = jnp.maximum(m_old, tile_max)
        l_ref[...] = (l_ref[...] * jnp.exp(m_old - m_new)
                      + jnp.sum(jnp.exp(v - m_new), axis=1, keepdims=True))
        m_ref[...] = m_new


def _normalize_kernel(zr_ref, zct_ref, keep_ref, m_ref, invl_ref, out_ref):
    """Pass 2: recompute the tile logits and write normalized softmax."""
    v = _masked_logits(zr_ref, zct_ref, keep_ref[...] != 0)
    out_ref[...] = jnp.exp(v - m_ref[...]) * invl_ref[...]


def _largest_divisor_tile(dim, target, granularity):
    """Largest t <= target that is a multiple of `granularity` and divides
    `dim`; None if no such t exists."""
    t = (target // granularity) * granularity
    while t >= granularity:
        if dim % t == 0:
            return t
        t -= granularity
    return None


def _pick_tile(dim, target, granularity):
    if dim <= target:
        return dim
    t = _largest_divisor_tile(dim, target, granularity)
    return t if t is not None else dim   # full dim is always a legal block


def inner_product_decoder(z, mask, batch_size, *, row_tile=1024, col_tile=1024):
    """z: (N, D) float, mask: (N, N) float -> (N, N) float32 softmax probs."""
    N, D = z.shape
    assert mask.shape == (N, N)
    # TODO(synk): torch only requires batch_size | N*N; softmax groups that
    # split a matrix row (batch_size not dividing N) are not supported here.
    assert N % batch_size == 0, "batch_size must divide N"

    z = z.astype(jnp.float32)
    zt = z.T                             # (D, N): one-time O(N*D) transpose
    mask = mask.astype(jnp.float32)

    # Row tiles: multiples of 32 when possible (int8 keep-mask native sublane
    # packing), and small enough that the "parallel" row axis has >= 2 steps so
    # v7x's two TensorCores both get work. Column tiles: lane-dense multiples
    # of 128 (or full dim). 1024 defaults keep the double-buffered footprint
    # ~11 MiB, comfortably inside scoped VMEM on v5e / v6e / v7x.
    row_gran = 32 if N % 32 == 0 else 8
    row_target = min(row_tile, N // 2) if N >= 2 * row_gran else row_tile
    row_target = max(row_target, row_gran)
    tr = _pick_tile(N, row_target, row_gran)
    tn = _pick_tile(N, col_tile, 128)
    kr, kc = N // tr, N // tn

    vmem_limit = 32 * 1024 * 1024

    # ---- Pass 1: per-row (max, sum_exp) stats + int8 keep mask ---------------
    m_rows, l_rows, keep = pl.pallas_call(
        _stats_kernel,
        out_shape=(
            jax.ShapeDtypeStruct((N, 1), jnp.float32),
            jax.ShapeDtypeStruct((N, 1), jnp.float32),
            jax.ShapeDtypeStruct((N, N), jnp.int8),
        ),
        grid_spec=pltpu.PrefetchScalarGridSpec(
            num_scalar_prefetch=0,
            grid=(kr, kc),
            in_specs=[
                pl.BlockSpec((tr, D), lambda i, k: (i, 0)),    # z row tile
                pl.BlockSpec((D, tn), lambda i, k: (0, k)),    # zT col tile
                pl.BlockSpec((tr, tn), lambda i, k: (i, k)),   # f32 mask tile
            ],
            out_specs=[
                pl.BlockSpec((tr, 1), lambda i, k: (i, 0)),    # running max
                pl.BlockSpec((tr, 1), lambda i, k: (i, 0)),    # running sum_exp
                pl.BlockSpec((tr, tn), lambda i, k: (i, k)),   # int8 keep mask
            ],
        ),
        compiler_params=pltpu.CompilerParams(
            dimension_semantics=("parallel", "arbitrary"),
            vmem_limit_bytes=vmem_limit),
    )(z, zt, mask)

    # ---- O(N) glue: per-row stats -> per-softmax-group stats -----------------
    # One softmax row of the (B, N*N/B) view == N/B consecutive matrix rows.
    rows_per_group = N // batch_size
    m_r = m_rows.reshape(batch_size, rows_per_group)
    l_r = l_rows.reshape(batch_size, rows_per_group)
    m_g = jnp.max(m_r, axis=1, keepdims=True)                        # (B, 1)
    l_g = jnp.sum(l_r * jnp.exp(m_r - m_g), axis=1, keepdims=True)   # (B, 1)
    inv_l_g = 1.0 / l_g                                              # exact, O(B)
    m_row = jnp.broadcast_to(m_g, (batch_size, rows_per_group)).reshape(N, 1)
    invl_row = jnp.broadcast_to(inv_l_g, (batch_size, rows_per_group)).reshape(N, 1)

    # ---- Pass 2: recompute logits, normalize, write output -------------------
    out = pl.pallas_call(
        _normalize_kernel,
        out_shape=jax.ShapeDtypeStruct((N, N), jnp.float32),
        grid_spec=pltpu.PrefetchScalarGridSpec(
            num_scalar_prefetch=0,
            grid=(kr, kc),
            in_specs=[
                pl.BlockSpec((tr, D), lambda i, k: (i, 0)),    # z row tile
                pl.BlockSpec((D, tn), lambda i, k: (0, k)),    # zT col tile
                pl.BlockSpec((tr, tn), lambda i, k: (i, k)),   # int8 keep mask
                pl.BlockSpec((tr, 1), lambda i, k: (i, 0)),    # group max per row
                pl.BlockSpec((tr, 1), lambda i, k: (i, 0)),    # 1/group sum per row
            ],
            out_specs=pl.BlockSpec((tr, tn), lambda i, k: (i, k)),
        ),
        compiler_params=pltpu.CompilerParams(
            dimension_semantics=("parallel", "parallel"),
            vmem_limit_bytes=vmem_limit),
    )(z, zt, keep, m_row, invl_row)

    return out


if __name__ == "__main__":
    key = jax.random.PRNGKey(0)
    k_z, k_m = jax.random.split(key)

    # Small shapes consistent with the module: N=16 nodes, D=32 latent dims,
    # batch_size=8 (divides N).
    N, D, batch_size = 16, 32, 8
    z = jax.random.normal(k_z, (N, D), dtype=jnp.float32)
    mask = (jax.random.uniform(k_m, (N, N)) > 0.3).astype(jnp.float32)

    decoder = jax.jit(inner_product_decoder, static_argnames=("batch_size",))
    out = decoder(z, mask, batch_size=batch_size)
    out = jax.block_until_ready(out)

    # Structural checks: shape, and every softmax row of the (B, -1) view
    # sums to 1.
    assert out.shape == mask.shape
    row_sums = out.reshape(batch_size, -1).sum(axis=1)
    assert bool(jnp.allclose(row_sums, 1.0, atol=1e-4)), row_sums

    # Reference check (tight-ish tolerance: the in-kernel matmul now uses
    # precision=HIGHEST, matching the f32 reference closely).
    v_ref = jnp.dot(z, z.T, precision=lax.Precision.HIGHEST)
    v_ref = jnp.where(mask < 1e-8, -1000.0, v_ref)
    ref = jax.nn.softmax(v_ref.reshape(batch_size, -1), axis=1).reshape(N, N)
    assert bool(jnp.allclose(out, ref, atol=1e-3, rtol=1e-3)), float(
        jnp.max(jnp.abs(out - ref)))

    print("KERNEL_OK")
</pallas_src>

<mosaic_0001>
module attributes {stable_mosaic.version = 11 : i64} {
  func.func @_stats_kernel(%arg0: i32, %arg1: i32, %arg2: memref<8x32xf32, #tpu.memory_space<vmem>>, %arg3: memref<32x16xf32, #tpu.memory_space<vmem>>, %arg4: memref<8x16xf32, #tpu.memory_space<vmem>>, %arg5: memref<8x1xf32, #tpu.memory_space<vmem>>, %arg6: memref<8x1xf32, #tpu.memory_space<vmem>>, %arg7: memref<8x16xi8, #tpu.memory_space<vmem>>) attributes {dimension_semantics = [#tpu.dimension_semantics<parallel>, #tpu.dimension_semantics<arbitrary>], iteration_bounds = array<i64: 2, 1>, scalar_prefetch = 0 : i64, scratch_operands = 0 : i64, tpu.core_type = #tpu.core_type<tc>, window_params = [{transform_indices = @transform_0, window_bounds = array<i64: 8, 32>}, {transform_indices = @transform_1, window_bounds = array<i64: 32, 16>}, {transform_indices = @transform_2, window_bounds = array<i64: 8, 16>}, {transform_indices = @transform_3, window_bounds = array<i64: 8, 1>}, {transform_indices = @transform_4, window_bounds = array<i64: 8, 1>}, {transform_indices = @transform_5, window_bounds = array<i64: 8, 16>}]} {
    %c0 = arith.constant 0 : index
    %c0_0 = arith.constant 0 : index
    %0 = vector.load %arg4[%c0, %c0_0] : memref<8x16xf32, #tpu.memory_space<vmem>>, vector<8x16xf32>
    %cst = arith.constant 9.99999993E-9 : f32
    %1 = vector.broadcast %cst : f32 to vector<8x16xf32>
    %2 = arith.cmpf oge, %0, %1 : vector<8x16xf32>
    %3 = arith.extui %2 : vector<8x16xi1> to vector<8x16xi8>
    %c0_1 = arith.constant 0 : index
    %c0_2 = arith.constant 0 : index
    %4 = vector.load %arg7[%c0_1, %c0_2] : memref<8x16xi8, #tpu.memory_space<vmem>>, vector<8x16xi8>
    tpu.vector_store %arg7[%c0_1, %c0_2], %3 {strides = array<i32>} : memref<8x16xi8, #tpu.memory_space<vmem>>, vector<8x16xi8>,
    %c0_3 = arith.constant 0 : index
    %c0_4 = arith.constant 0 : index
    %5 = vector.load %arg2[%c0_3, %c0_4] : memref<8x32xf32, #tpu.memory_space<vmem>>, vector<8x32xf32>
    %c0_5 = arith.constant 0 : index
    %c0_6 = arith.constant 0 : index
    %6 = vector.load %arg3[%c0_5, %c0_6] : memref<32x16xf32, #tpu.memory_space<vmem>>, vector<32x16xf32>
    %cst_7 = arith.constant dense<0.000000e+00> : vector<8x16xf32>
    %7 = tpu.matmul %5, %6, %cst_7 {dimension_numbers = #tpu.dot_dimension_numbers<[1], [0], [0], [1], [0, 0, 1, 1], [], []>, precision = #tpu.contract_precision<fp32>} : vector<8x32xf32>, vector<32x16xf32>, vector<8x16xf32> -> vector<8x16xf32>
    %cst_8 = arith.constant -1.000000e+03 : f32
    %8 = vector.broadcast %cst_8 : f32 to vector<8x16xf32>
    %9 = arith.select %2, %7, %8 : vector<8x16xi1>, vector<8x16xf32>
    %cst_9 = arith.constant dense<0xFF800000> : vector<8xf32>
    %10 = vector.multi_reduction <maximumf>, %9, %cst_9 [1] : vector<8x16xf32> to vector<8xf32>
    %11 = vector.shape_cast %10 : vector<8xf32> to vector<8x1xf32>
    %c0_i32 = arith.constant 0 : i32
    %12 = arith.cmpi eq, %arg1, %c0_i32 : i32
    %13 = arith.extui %12 : i1 to i32
    %c0_i32_10 = arith.constant 0 : i32
    %14 = arith.cmpi ne, %13, %c0_i32_10 : i32
    scf.if %14 {
      %c0_13 = arith.constant 0 : index
      %c0_14 = arith.constant 0 : index
      %18 = vector.load %arg5[%c0_13, %c0_14] : memref<8x1xf32, #tpu.memory_space<vmem>>, vector<8x1xf32>
      tpu.vector_store %arg5[%c0_13, %c0_14], %11 {strides = array<i32>} : memref<8x1xf32, #tpu.memory_space<vmem>>, vector<8x1xf32>,
      %19 = vector.broadcast %11 : vector<8x1xf32> to vector<8x16xf32>
      %20 = arith.subf %9, %19 : vector<8x16xf32>
      %21 = math.exp %20 : vector<8x16xf32>
      %cst_15 = arith.constant dense<0.000000e+00> : vector<8xf32>
      %22 = vector.multi_reduction <add>, %21, %cst_15 [1] : vector<8x16xf32> to vector<8xf32>
      %23 = vector.shape_cast %22 : vector<8xf32> to vector<8x1xf32>
      %c0_16 = arith.constant 0 : index
      %c0_17 = arith.constant 0 : index
      %24 = vector.load %arg6[%c0_16, %c0_17] : memref<8x1xf32, #tpu.memory_space<vmem>>, vector<8x1xf32>
      tpu.vector_store %arg6[%c0_16, %c0_17], %23 {strides = array<i32>} : memref<8x1xf32, #tpu.memory_space<vmem>>, vector<8x1xf32>,
    } else {
    }
    %c0_i32_11 = arith.constant 0 : i32
    %15 = arith.cmpi ne, %arg1, %c0_i32_11 : i32
    %16 = arith.extui %15 : i1 to i32
    %c0_i32_12 = arith.constant 0 : i32
    %17 = arith.cmpi ne, %16, %c0_i32_12 : i32
    scf.if %17 {
      %c0_13 = arith.constant 0 : index
      %c0_14 = arith.constant 0 : index
      %18 = vector.load %arg5[%c0_13, %c0_14] : memref<8x1xf32, #tpu.memory_space<vmem>>, vector<8x1xf32>
      %19 = arith.maximumf %18, %11 : vector<8x1xf32>
      %c0_15 = arith.constant 0 : index
      %c0_16 = arith.constant 0 : index
      %20 = vector.load %arg6[%c0_15, %c0_16] : memref<8x1xf32, #tpu.memory_space<vmem>>, vector<8x1xf32>
      %21 = arith.subf %18, %19 : vector<8x1xf32>
      %22 = math.exp %21 : vector<8x1xf32>
      %23 = arith.mulf %20, %22 : vector<8x1xf32>
      %24 = vector.broadcast %19 : vector<8x1xf32> to vector<8x16xf32>
      %25 = arith.subf %9, %24 : vector<8x16xf32>
      %26 = math.exp %25 : vector<8x16xf32>
      %cst_17 = arith.constant dense<0.000000e+00> : vector<8xf32>
      %27 = vector.multi_reduction <add>, %26, %cst_17 [1] : vector<8x16xf32> to vector<8xf32>
      %28 = vector.shape_cast %27 : vector<8xf32> to vector<8x1xf32>
      %29 = arith.addf %23, %28 : vector<8x1xf32>
      %c0_18 = arith.constant 0 : index
      %c0_19 = arith.constant 0 : index
      %30 = vector.load %arg6[%c0_18, %c0_19] : memref<8x1xf32, #tpu.memory_space<vmem>>, vector<8x1xf32>
      tpu.vector_store %arg6[%c0_18, %c0_19], %29 {strides = array<i32>} : memref<8x1xf32, #tpu.memory_space<vmem>>, vector<8x1xf32>,
      %c0_20 = arith.constant 0 : index
      %c0_21 = arith.constant 0 : index
      %31 = vector.load %arg5[%c0_20, %c0_21] : memref<8x1xf32, #tpu.memory_space<vmem>>, vector<8x1xf32>
      tpu.vector_store %arg5[%c0_20, %c0_21], %19 {strides = array<i32>} : memref<8x1xf32, #tpu.memory_space<vmem>>, vector<8x1xf32>,
    } else {
    }
    return
  }
  func.func @transform_0(%arg0: i32, %arg1: i32) -> (i32, i32) {
    %c0_i32 = arith.constant 0 : i32
    %c0_i32_0 = arith.constant 0 : i32
    return %arg0, %c0_i32 : i32, i32
  }
  func.func @transform_1(%arg0: i32, %arg1: i32) -> (i32, i32) {
    %c0_i32 = arith.constant 0 : i32
    %c0_i32_0 = arith.constant 0 : i32
    return %c0_i32, %arg1 : i32, i32
  }
  func.func @transform_2(%arg0: i32, %arg1: i32) -> (i32, i32) {
    %c0_i32 = arith.constant 0 : i32
    return %arg0, %arg1 : i32, i32
  }
  func.func @transform_3(%arg0: i32, %arg1: i32) -> (i32, i32) {
    %c0_i32 = arith.constant 0 : i32
    %c0_i32_0 = arith.constant 0 : i32
    return %arg0, %c0_i32 : i32, i32
  }
  func.func @transform_4(%arg0: i32, %arg1: i32) -> (i32, i32) {
    %c0_i32 = arith.constant 0 : i32
    %c0_i32_0 = arith.constant 0 : i32
    return %arg0, %c0_i32 : i32, i32
  }
  func.func @transform_5(%arg0: i32, %arg1: i32) -> (i32, i32) {
    %c0_i32 = arith.constant 0 : i32
    return %arg0, %arg1 : i32, i32
  }
}

module attributes {stable_mosaic.version = 11 : i64} {
  func.func @_normalize_kernel(%arg0: i32, %arg1: i32, %arg2: memref<8x32xf32, #tpu.memory_space<vmem>>, %arg3: memref<32x16xf32, #tpu.memory_space<vmem>>, %arg4: memref<8x16xi8, #tpu.memory_space<vmem>>, %arg5: memref<8x1xf32, #tpu.memory_space<vmem>>, %arg6: memref<8x1xf32, #tpu.memory_space<vmem>>, %arg7: memref<8x16xf32, #tpu.memory_space<vmem>>) attributes {dimension_semantics = [#tpu.dimension_semantics<parallel>, #tpu.dimension_semantics<parallel>], iteration_bounds = array<i64: 2, 1>, scalar_prefetch = 0 : i64, scratch_operands = 0 : i64, tpu.core_type = #tpu.core_type<tc>, window_params = [{transform_indices = @transform_0, window_bounds = array<i64: 8, 32>}, {transform_indices = @transform_1, window_bounds = array<i64: 32, 16>}, {transform_indices = @transform_2, window_bounds = array<i64: 8, 16>}, {transform_indices = @transform_3, window_bounds = array<i64: 8, 1>}, {transform_indices = @transform_4, window_bounds = array<i64: 8, 1>}, {transform_indices = @transform_5, window_bounds = array<i64: 8, 16>}]} {
    %c0 = arith.constant 0 : index
    %c0_0 = arith.constant 0 : index
    %0 = vector.load %arg4[%c0, %c0_0] : memref<8x16xi8, #tpu.memory_space<vmem>>, vector<8x16xi8>
    %c0_i8 = arith.constant 0 : i8
    %1 = vector.broadcast %c0_i8 : i8 to vector<8x16xi8>
    %2 = arith.cmpi ne, %0, %1 : vector<8x16xi8>
    %c0_1 = arith.constant 0 : index
    %c0_2 = arith.constant 0 : index
    %3 = vector.load %arg2[%c0_1, %c0_2] : memref<8x32xf32, #tpu.memory_space<vmem>>, vector<8x32xf32>
    %c0_3 = arith.constant 0 : index
    %c0_4 = arith.constant 0 : index
    %4 = vector.load %arg3[%c0_3, %c0_4] : memref<32x16xf32, #tpu.memory_space<vmem>>, vector<32x16xf32>
    %cst = arith.constant dense<0.000000e+00> : vector<8x16xf32>
    %5 = tpu.matmul %3, %4, %cst {dimension_numbers = #tpu.dot_dimension_numbers<[1], [0], [0], [1], [0, 0, 1, 1], [], []>, precision = #tpu.contract_precision<fp32>} : vector<8x32xf32>, vector<32x16xf32>, vector<8x16xf32> -> vector<8x16xf32>
    %cst_5 = arith.constant -1.000000e+03 : f32
    %6 = vector.broadcast %cst_5 : f32 to vector<8x16xf32>
    %7 = arith.select %2, %5, %6 : vector<8x16xi1>, vector<8x16xf32>
    %c0_6 = arith.constant 0 : index
    %c0_7 = arith.constant 0 : index
    %8 = vector.load %arg5[%c0_6, %c0_7] : memref<8x1xf32, #tpu.memory_space<vmem>>, vector<8x1xf32>
    %9 = vector.broadcast %8 : vector<8x1xf32> to vector<8x16xf32>
    %10 = arith.subf %7, %9 : vector<8x16xf32>
    %11 = math.exp %10 : vector<8x16xf32>
    %c0_8 = arith.constant 0 : index
    %c0_9 = arith.constant 0 : index
    %12 = vector.load %arg6[%c0_8, %c0_9] : memref<8x1xf32, #tpu.memory_space<vmem>>, vector<8x1xf32>
    %13 = vector.broadcast %12 : vector<8x1xf32> to vector<8x16xf32>
    %14 = arith.mulf %11, %13 : vector<8x16xf32>
    %c0_10 = arith.constant 0 : index
    %c0_11 = arith.constant 0 : index
    %15 = vector.load %arg7[%c0_10, %c0_11] : memref<8x16xf32, #tpu.memory_space<vmem>>, vector<8x16xf32>
    tpu.vector_store %arg7[%c0_10, %c0_11], %14 {strides = array<i32>} : memref<8x16xf32, #tpu.memory_space<vmem>>, vector<8x16xf32>,
    return
  }
  func.func @transform_0(%arg0: i32, %arg1: i32) -> (i32, i32) {
    %c0_i32 = arith.constant 0 : i32
    %c0_i32_0 = arith.constant 0 : i32
    return %arg0, %c0_i32 : i32, i32
  }
  func.func @transform_1(%arg0: i32, %arg1: i32) -> (i32, i32) {
    %c0_i32 = arith.constant 0 : i32
    %c0_i32_0 = arith.constant 0 : i32
    return %c0_i32, %arg1 : i32, i32
  }
  func.func @transform_2(%arg0: i32, %arg1: i32) -> (i32, i32) {
    %c0_i32 = arith.constant 0 : i32
    return %arg0, %arg1 : i32, i32
  }
  func.func @transform_3(%arg0: i32, %arg1: i32) -> (i32, i32) {
    %c0_i32 = arith.constant 0 : i32
    %c0_i32_0 = arith.constant 0 : i32
    return %arg0, %c0_i32 : i32, i32
  }
  func.func @transform_4(%arg0: i32, %arg1: i32) -> (i32, i32) {
    %c0_i32 = arith.constant 0 : i32
    %c0_i32_0 = arith.constant 0 : i32
    return %arg0, %c0_i32 : i32, i32
  }
  func.func @transform_5(%arg0: i32, %arg1: i32) -> (i32, i32) {
    %c0_i32 = arith.constant 0 : i32
    return %arg0, %arg1 : i32, i32
  }
}

</mosaic_0001>

<llo_original>
// kernel: inner_product_decoder.2
$region0: #{inner_product_decoder.2}
  #allocation0 [shape = 'u32[]', space=smem, size = 0x4, offset = 0x4, fixed_abs, tag = 'smem constant byte address 0x4 - core index']
  #allocation1 [shape = 'u32[144,128]{1,0:T(1,128)}', space=vmem, size = 0x12000, scoped, tag = 'internal scratch']
  %s0 = inlined_call_operand.vmem [shape: f32[16,32], index: 0, kind: input, shape index: {}]
  %s1 = inlined_call_operand.vmem [shape: f32[32,16], index: 1, kind: input, shape index: {}]
  %s2 = inlined_call_operand.vmem [shape: f32[16,16], index: 2, kind: input, shape index: {}]
  %s3 = inlined_call_operand.vmem [shape: f32[16,1], index: 3, kind: output, shape index: {0}]
  %s4 = inlined_call_operand.vmem [shape: f32[16,1], index: 4, kind: output, shape index: {1}]
  %s5 = inlined_call_operand.vmem [shape: s8[16,16], index: 5, kind: output, shape index: {2}]
  %6 = xla_tuple %s3, %s4, %s5
  %s7 = sld [smem:[#allocation0]]
  $region69: #{inner_product_decoder.2} parent=0
    _
  %s9 = ssub.s32 1, %s7
  %s10 = scalar_select 0, %s9, %s7
  loop: start=0, step=1, limit=4
  $region2: #{inner_product_decoder.2} parent=0 // loop_pre_header
    _
  $region3: #{inner_product_decoder.2} parent=0 // loop_header
    %s12 = sphi 0, %s16
    %p13 = scmp.ge.s32.totalorder %s12, 4
    %s19 = sphi 0, %s31
    %s20 = sphi 0, %s27
    %s21 = sphi 0, %s19
    %s22 = sphi 0, %s20
    %s23 = sphi 0, %s21
    %s24 = sphi 0, %s22
    %s34 = sphi 0, %s36
    %s37 = sphi 0, %s34
    %s38 = sphi 0, %s37
    %s54 = sphi 0, %s38
    %s60 = sphi 0, %s62
    %s63 = sphi 0, %s60
    %s64 = sphi 0, %s63
    %s80 = sphi 0, %s64
    %s88 = sphi 0, %s90
    %s91 = sphi 0, %s88
    %s92 = sphi 0, %s91
    %s108 = sphi 0, %s92
    %s114 = sphi 0, %s116
    %s117 = sphi 0, %s114
    %s118 = sphi 0, %s117
    %s134 = sphi 0, %s118
    %s140 = sphi 0, %s142
    %s143 = sphi 0, %s140
    %s144 = sphi 0, %s143
    %s160 = sphi 0, %s144
    %s168 = sphi 0, %s170
    %s171 = sphi 0, %s168
    %s172 = sphi 0, %s171
    %s188 = sphi 0, %s172
  $region4: #{inner_product_decoder.2} parent=0 // loop_header_branch
    %15 = sbr.rel (%p13) target = $region8
  $region5: #{inner_product_decoder.2} parent=0 // loop_body
    %s17 = ssub.s32 %s12, 1
    %s18 = ssub.s32 %s12, 2
    %s25 = sadd.s32 1, %s20
    %p26 = scmp.ge.s32.totalorder %s25, 1
    %s27 = scalar_select %p26, 0, %s25
    %s28 = sadd.s32 1, %s19
    %s29 = scalar_select %p26, %s28, %s19
    %p30 = scmp.ge.s32.totalorder %s29, 2
    %s31 = scalar_select %p30, 0, %s29
    %s32 = ssub.s32 %s19, %s31
    %p33 = scmp.eq.s32.totalorder %s32, 0
    %s35 = sadd.s32 %s34, 1
    %s36 = scalar_select %p33, %s34, %s35
    %p39 = pneg %p33
    %p40 = scmp.eq.s32.totalorder %s12, 1
    %p41 = por %p39, %p40
    %p42 = scmp.ne.s32.totalorder %s34, %s37
    %p43 = scmp.eq.s32.totalorder %s12, 0
    %p44 = por %p42, %p43
    %p45 = scmp.ne.s32.totalorder %s34, %s37
    %p46 = scmp.eq.s32.totalorder %s17, 1
    %p47 = por %p45, %p46
    %p48 = scmp.ne.s32.totalorder %s37, %s38
    %p49 = scmp.eq.s32.totalorder %s17, 0
    %p50 = por %p48, %p49
    %p51 = scmp.ne.s32.totalorder %s37, %s38
    %p52 = scmp.eq.s32.totalorder %s18, 1
    %p53 = por %p51, %p52
    %p55 = scmp.ne.s32.totalorder %s38, %s54
    %p56 = scmp.eq.s32.totalorder %s18, 0
    %p57 = por %p55, %p56
    %s58 = ssub.s32 %s20, %s27
    %p59 = scmp.eq.s32.totalorder %s58, 0
    %s61 = sadd.s32 %s60, 1
    %s62 = scalar_select %p59, %s60, %s61
    %p65 = pneg %p59
    %p66 = scmp.eq.s32.totalorder %s12, 1
    %p67 = por %p65, %p66
    %p68 = scmp.ne.s32.totalorder %s60, %s63
    %p69 = scmp.eq.s32.totalorder %s12, 0
    %p70 = por %p68, %p69
    %p71 = scmp.ne.s32.totalorder %s60, %s63
    %p72 = scmp.eq.s32.totalorder %s17, 1
    %p73 = por %p71, %p72
    %p74 = scmp.ne.s32.totalorder %s63, %s64
    %p75 = scmp.eq.s32.totalorder %s17, 0
    %p76 = por %p74, %p75
    %p77 = scmp.ne.s32.totalorder %s63, %s64
    %p78 = scmp.eq.s32.totalorder %s18, 1
    %p79 = por %p77, %p78
    %p81 = scmp.ne.s32.totalorder %s64, %s80
    %p82 = scmp.eq.s32.totalorder %s18, 0
    %p83 = por %p81, %p82
    %s84 = ssub.s32 %s19, %s31
    %s85 = ssub.s32 %s20, %s27
    %s86 = sor.u32 %s84, %s85
    %p87 = scmp.eq.s32.totalorder %s86, 0
    %s89 = sadd.s32 %s88, 1
    %s90 = scalar_select %p87, %s88, %s89
    %p93 = pneg %p87
    %p94 = scmp.eq.s32.totalorder %s12, 1
    %p95 = por %p93, %p94
    %p96 = scmp.ne.s32.totalorder %s88, %s91
    %p97 = scmp.eq.s32.totalorder %s12, 0
    %p98 = por %p96, %p97
    %p99 = scmp.ne.s32.totalorder %s88, %s91
    %p100 = scmp.eq.s32.totalorder %s17, 1
    %p101 = por %p99, %p100
    %p102 = scmp.ne.s32.totalorder %s91, %s92
    %p103 = scmp.eq.s32.totalorder %s17, 0
    %p104 = por %p102, %p103
    %p105 = scmp.ne.s32.totalorder %s91, %s92
    %p106 = scmp.eq.s32.totalorder %s18, 1
    %p107 = por %p105, %p106
    %p109 = scmp.ne.s32.totalorder %s92, %s108
    %p110 = scmp.eq.s32.totalorder %s18, 0
    %p111 = por %p109, %p110
    %s112 = ssub.s32 %s19, %s31
    %p113 = scmp.eq.s32.totalorder %s112, 0
    %s115 = sadd.s32 %s114, 1
    %s116 = scalar_select %p113, %s114, %s115
    %p119 = pneg %p113
    %p120 = scmp.eq.s32.totalorder %s12, 1
    %p121 = por %p119, %p120
    %p122 = scmp.ne.s32.totalorder %s114, %s117
    %p123 = scmp.eq.s32.totalorder %s12, 0
    %p124 = por %p122, %p123
    %p125 = scmp.ne.s32.totalorder %s114, %s117
    %p126 = scmp.eq.s32.totalorder %s17, 1
    %p127 = por %p125, %p126
    %p128 = scmp.ne.s32.totalorder %s117, %s118
    %p129 = scmp.eq.s32.totalorder %s17, 0
    %p130 = por %p128, %p129
    %p131 = scmp.ne.s32.totalorder %s117, %s118
    %p132 = scmp.eq.s32.totalorder %s18, 1
    %p133 = por %p131, %p132
    %p135 = scmp.ne.s32.totalorder %s118, %s134
    %p136 = scmp.eq.s32.totalorder %s18, 0
    %p137 = por %p135, %p136
    %s138 = ssub.s32 %s19, %s31
    %p139 = scmp.eq.s32.totalorder %s138, 0
    %s141 = sadd.s32 %s140, 1
    %s142 = scalar_select %p139, %s140, %s141
    %p145 = pneg %p139
    %p146 = scmp.eq.s32.totalorder %s12, 1
    %p147 = por %p145, %p146
    %p148 = scmp.ne.s32.totalorder %s140, %s143
    %p149 = scmp.eq.s32.totalorder %s12, 0
    %p150 = por %p148, %p149
    %p151 = scmp.ne.s32.totalorder %s140, %s143
    %p152 = scmp.eq.s32.totalorder %s17, 1
    %p153 = por %p151, %p152
    %p154 = scmp.ne.s32.totalorder %s143, %s144
    %p155 = scmp.eq.s32.totalorder %s17, 0
    %p156 = por %p154, %p155
    %p157 = scmp.ne.s32.totalorder %s143, %s144
    %p158 = scmp.eq.s32.totalorder %s18, 1
    %p159 = por %p157, %p158
    %p161 = scmp.ne.s32.totalorder %s144, %s160
    %p162 = scmp.eq.s32.totalorder %s18, 0
    %p163 = por %p161, %p162
    %s164 = ssub.s32 %s19, %s31
    %s165 = ssub.s32 %s20, %s27
    %s166 = sor.u32 %s164, %s165
    %p167 = scmp.eq.s32.totalorder %s166, 0
    %s169 = sadd.s32 %s168, 1
    %s170 = scalar_select %p167, %s168, %s169
    %p173 = pneg %p167
    %p174 = scmp.eq.s32.totalorder %s12, 1
    %p175 = por %p173, %p174
    %p176 = scmp.ne.s32.totalorder %s168, %s171
    %p177 = scmp.eq.s32.totalorder %s12, 0
    %p178 = por %p176, %p177
    %p179 = scmp.ne.s32.totalorder %s168, %s171
    %p180 = scmp.eq.s32.totalorder %s17, 1
    %p181 = por %p179, %p180
    %p182 = scmp.ne.s32.totalorder %s171, %s172
    %p183 = scmp.eq.s32.totalorder %s17, 0
    %p184 = por %p182, %p183
    %p185 = scmp.ne.s32.totalorder %s171, %s172
    %p186 = scmp.eq.s32.totalorder %s18, 1
    %p187 = por %p185, %p186
    %p189 = scmp.ne.s32.totalorder %s172, %s188
    %p190 = scmp.eq.s32.totalorder %s18, 0
    %p191 = por %p189, %p190
    %p192 = scmp.le.s32.totalorder 1, %s12
    %p193 = scmp.lt.s32.totalorder %s12, 3
    %p194 = pnand %p192, %p193
    %p195 = pneg %p194
    // Predicated region
    $region9: #{inner_product_decoder.2} parent=5 // pred_check
      _
    $region10: #{inner_product_decoder.2} parent=5 // pred_check_branch
      %197 = sbr.rel (%p194) target = $region12
    $region11: #{inner_product_decoder.2} parent=5 // pred_region
      %s198 = ssub.s32 %s12, 1
      // Predicated region
      $region13: #{inner_product_decoder.2} parent=11 // pred_check
        %p199 = pneg %p76
      $region14: #{inner_product_decoder.2} parent=11 // pred_check_branch
        %201 = sbr.rel (%p199) target = $region16
      $region15: #{inner_product_decoder.2} parent=11 // pred_region
        %p202 = scmp.lt.s32.totalorder %s22, 0
        %s203 = scalar_select %p202, %s22, 0
        %s204 = smul.addr %s203, 8
        %s205 = scalar_lea.vmem %s1, %s204
      $region16: #{inner_product_decoder.2} parent=11 // pred_fallthru
        _
    $region12: #{inner_product_decoder.2} parent=5 // pred_fallthru
      _
    %p206 = scmp.lt.s32.totalorder %s12, 2
    // Predicated region
    $region17: #{inner_product_decoder.2} parent=5 // pred_check
      %p207 = pneg %p206
    $region18: #{inner_product_decoder.2} parent=5 // pred_check_branch
      %209 = sbr.rel (%p207) target = $region20
    $region19: #{inner_product_decoder.2} parent=5 // pred_region
      // Predicated region
      $region21: #{inner_product_decoder.2} parent=19 // pred_check
        %p210 = pneg %p44
      $region22: #{inner_product_decoder.2} parent=19 // pred_check_branch
        %212 = sbr.rel (%p210) target = $region24
      $region23: #{inner_product_decoder.2} parent=19 // pred_region
        %p213 = scmp.lt.s32.totalorder %s19, 1
        %s214 = scalar_select %p213, %s19, 1
        %s215 = smul.addr %s214, 8
        %s216 = scalar_lea.vmem %s0, %s215
      $region24: #{inner_product_decoder.2} parent=19 // pred_fallthru
        _
      // Predicated region
      $region25: #{inner_product_decoder.2} parent=19 // pred_check
        %p217 = pneg %p98
      $region26: #{inner_product_decoder.2} parent=19 // pred_check_branch
        %219 = sbr.rel (%p217) target = $region28
      $region27: #{inner_product_decoder.2} parent=19 // pred_region
        %p220 = scmp.lt.s32.totalorder %s19, 1
        %s221 = scalar_select %p220, %s19, 1
        %p222 = scmp.lt.s32.totalorder %s20, 0
        %s223 = scalar_select %p222, %s20, 0
        %s224 = sadd.s32 %s223, %s221
        %s225 = smul.addr %s224, 8
        %s226 = scalar_lea.vmem %s2, %s225
      $region28: #{inner_product_decoder.2} parent=19 // pred_fallthru
        _
    $region20: #{inner_product_decoder.2} parent=5 // pred_fallthru
      _
    %p227 = scmp.le.s32.totalorder 1, %s12
    %p228 = scmp.lt.s32.totalorder %s12, 3
    %p229 = pnand %p227, %p228
    %p230 = pneg %p229
    // Predicated region
    $region29: #{inner_product_decoder.2} parent=5 // pred_check
      _
    $region30: #{inner_product_decoder.2} parent=5 // pred_check_branch
      %232 = sbr.rel (%p229) target = $region32
    $region31: #{inner_product_decoder.2} parent=5 // pred_region
      %s233 = ssub.s32 %s12, 1
      %p234 = scmp.lt.s32.totalorder %s21, 1
      %s235 = scalar_select %p234, %s21, 1
      %s236 = smul.addr %s235, 8
      %s237 = scalar_lea.vmem %s0, %s236
      %p238 = pneg %p50
      %p239 = pneg %p47
      %p240 = scmp.lt.s32.totalorder %s22, 0
      %s241 = scalar_select %p240, %s22, 0
      %s242 = smul.addr %s241, 8
      %s243 = scalar_lea.vmem %s1, %s242
      %p244 = pneg %p76
      %p245 = pneg %p73
      %p246 = scmp.lt.s32.totalorder %s21, 1
      %s247 = scalar_select %p246, %s21, 1
      %p248 = scmp.lt.s32.totalorder %s22, 0
      %s249 = scalar_select %p248, %s22, 0
      %s250 = sadd.s32 %s249, %s247
      %s251 = smul.addr %s250, 8
      %s252 = scalar_lea.vmem %s2, %s251
      %p253 = pneg %p104
      %p254 = pneg %p101
      %p255 = pneg %p130
      %p256 = pneg %p127
      %p257 = scmp.lt.s32.totalorder %s21, 1
      %s258 = scalar_select %p257, %s21, 1
      %s259 = smul.addr %s258, 8
      %s260 = scalar_lea.vmem %s3, %s259
      %p261 = pneg %p156
      %p262 = pneg %p153
      %p263 = scmp.lt.s32.totalorder %s21, 1
      %s264 = scalar_select %p263, %s21, 1
      %s265 = smul.addr %s264, 8
      %s266 = scalar_lea.vmem %s4, %s265
      %p267 = pneg %p184
      %p268 = pneg %p181
      %p269 = scmp.lt.s32.totalorder %s21, 1
      %s270 = scalar_select %p269, %s21, 1
      %p271 = scmp.lt.s32.totalorder %s22, 0
      %s272 = scalar_select %p271, %s22, 0
      %s273 = sadd.s32 %s272, %s270
      %s274 = smul.addr %s273, 2
      %s275 = scalar_lea.vmem %s5, %s274
      %p276 = scmp.lt.s32.totalorder %s21, 1
      %s277 = scalar_select %p276, %s21, 1
      %s278 = smul.addr %s277, 8
      %s279 = scalar_lea.vmem %s0, %s278
      %p280 = scmp.lt.s32.totalorder %s22, 0
      %s281 = scalar_select %p280, %s22, 0
      %s282 = smul.addr %s281, 8
      %s283 = scalar_lea.vmem %s1, %s282
      %p284 = scmp.lt.s32.totalorder %s21, 1
      %s285 = scalar_select %p284, %s21, 1
      %p286 = scmp.lt.s32.totalorder %s22, 0
      %s287 = scalar_select %p286, %s22, 0
      %s288 = sadd.s32 %s287, %s285
      %s289 = smul.addr %s288, 8
      %s290 = scalar_lea.vmem %s2, %s289
      %p291 = scmp.lt.s32.totalorder %s21, 1
      %s292 = scalar_select %p291, %s21, 1
      %s293 = smul.addr %s292, 8
      %s294 = scalar_lea.vmem %s3, %s293
      %p295 = scmp.lt.s32.totalorder %s21, 1
      %s296 = scalar_select %p295, %s21, 1
      %s297 = smul.addr %s296, 8
      %s298 = scalar_lea.vmem %s4, %s297
      %p299 = scmp.lt.s32.totalorder %s21, 1
      %s300 = scalar_select %p299, %s21, 1
      %p301 = scmp.lt.s32.totalorder %s22, 0
      %s302 = scalar_select %p301, %s22, 0
      %s303 = sadd.s32 %s302, %s300
      %s304 = smul.addr %s303, 2
      %s305 = scalar_lea.vmem %s5, %s304
      %v308 = vld [vmem:[%s290] sm:$0xff]
      %vm309 = vcmp.ge.f32.partialorder %v308, 1e-08
      %vm310 = vmpackc.low %vm309, %vm309
      %vm311 = vmpackc.even %vm310, %vm310
      %v312 = vsel %vm311, 16843009, 0
      %vm313 = vcmask 123904
      %314 = vst.msk [vmem:[%s305] sm:$0x3] %vm313, %v312
      %v315 = vld [vmem:[%s279] sm:$0xff]
      %v316 = vld [vmem:[%s283] sm:$0xff]
      %v317 = vld [vmem:[%s283 + $0x8] sm:$0xff]
      %v318 = vld [vmem:[%s283 + $0x10] sm:$0xff]
      %v319 = vld [vmem:[%s283 + $0x18] sm:$0xff]
      %vm320 = vcmask 261120
      %v322 = vsel %vm320, %v315, 0
      %324 = vmatprep.subr.mxu0 0.0
      %v325 = vand.u32 %v316, 4294901760
      %326 = vmatpush1.msra.mxu0 %v325
      %327 = vmatprep.subr.mxu0 0.0
      %v328 = vand.u32 %v317, 4294901760
      %329 = vmatpush1.msra.mxu0 %v328
      %330 = vmatprep.subr.mxu0 0.0
      %v331 = vand.u32 %v318, 4294901760
      %332 = vmatpush1.msra.mxu0 %v331
      %333 = vmatprep.subr.mxu0 0.0
      %v334 = vand.u32 %v319, 4294901760
      %335 = vmatpush1.msra.mxu0 %v334
      %336 = vmatprep.subr.mxu0 0.0
      %337 = vmatpush1.msra.mxu0 0.0
      %338 = vmatprep.subr.mxu0 0.0
      %339 = vmatpush1.msra.mxu0 0.0
      %340 = vmatprep.subr.mxu0 0.0
      %341 = vmatpush1.msra.mxu0 0.0
      %342 = vmatprep.subr.mxu0 0.0
      %343 = vmatpush1.msra.mxu0 0.0
      %344 = vmatprep.subr.mxu0 0.0
      %345 = vmatpush1.msra.mxu0 0.0
      %346 = vmatprep.subr.mxu0 0.0
      %347 = vmatpush1.msra.mxu0 0.0
      %348 = vmatprep.subr.mxu0 0.0
      %349 = vmatpush1.msra.mxu0 0.0
      %350 = vmatprep.subr.mxu0 0.0
      %351 = vmatpush1.msra.mxu0 0.0
      %352 = vmatprep.subr.mxu0 0.0
      %353 = vmatpush1.msra.mxu0 0.0
      %354 = vmatprep.subr.mxu0 0.0
      %355 = vmatpush1.msra.mxu0 0.0
      %356 = vmatprep.subr.mxu0 0.0
      %357 = vmatpush1.msra.mxu0 0.0
      %358 = vmatprep.subr.mxu0 0.0
      %359 = vmatpush1.msra.mxu0 0.0
      %360 = vmatprep.subr.mxu0 0.0
      %361 = vmatpush1.msra.mxu0 0.0
      %362 = vmatprep.subr.mxu0 0.0
      %363 = vmatpush1.msra.mxu0 0.0
      %364 = vmatprep.subr.mxu0 0.0
      %365 = vmatpush1.msra.mxu0 0.0
      %366 = vmatprep.subr.mxu0 0.0
      %367 = vmatpush1.msra.mxu0 0.0
      %368 = vmatprep.subr.mxu0 0.0
      %369 = vmatpush1.msra.mxu0 0.0
      %370 = vmatprep.subr.mxu0 0.0
      %371 = vmatpush1.msra.mxu0 0.0
      %372 = vmatprep.subr.mxu0 0.0
      %373 = vmatpush1.msra.mxu0 0.0
      %374 = vmatprep.subr.mxu0 0.0
      %375 = vmatpush1.msra.mxu0 0.0
      %376 = vmatprep.subr.mxu0 0.0
      %377 = vmatpush1.msra.mxu0 0.0
      %378 = vmatprep.subr.mxu0 0.0
      %379 = vmatpush1.msra.mxu0 0.0
      %380 = vmatprep.subr.mxu0 0.0
      %381 = vmatpush1.msra.mxu0 0.0
      %382 = vmatprep.subr.mxu0 0.0
      %383 = vmatpush1.msra.mxu0 0.0
      %384 = vmatprep.subr.mxu0 0.0
      %385 = vmatpush1.msra.mxu0 0.0
      %386 = vmatprep.subr.mxu0 0.0
      %387 = vmatpush1.msra.mxu0 0.0
      %388 = vmatprep.subr.mxu0 0.0
      %389 = vmatpush1.msra.mxu0 0.0
      %390 = vmatprep.subr.mxu0 0.0
      %391 = vmatpush1.msra.mxu0 0.0
      %392 = vmatprep.mubr.f32.mxu0 0.0
      %v393 = vand.u32 %v322, 4294901760
      %v394 = vsub.f32 %v322, %v393
      %v395 = vand.u32 %v394, 4294901760
      %v396 = vsub.f32 %v394, %v395
      %v397 = vand.u32 %v396, 4294901760
      %398 = vmatmul.mubr.f32.gmra.mrb[0].mxu0 %v397
      %v399 = vpop.f32.mrb[0].mxu0
      %v400 = vadd.f32 0.0, %v399
      %v401 = vpop.f32.mrb[0].mxu0
      %402 = vdwg.mxu0
      %403 = vmatprep.subr.mxu0 0.0
      %v404 = vand.u32 %v316, 4294901760
      %v405 = vsub.f32 %v316, %v404
      %v406 = vand.u32 %v405, 4294901760
      %v407 = vsub.f32 %v405, %v406
      %v408 = vand.u32 %v407, 4294901760
      %409 = vmatpush1.msra.mxu0 %v408
      %410 = vmatprep.subr.mxu0 0.0
      %v411 = vand.u32 %v317, 4294901760
      %v412 = vsub.f32 %v317, %v411
      %v413 = vand.u32 %v412, 4294901760
      %v414 = vsub.f32 %v412, %v413
      %v415 = vand.u32 %v414, 4294901760
      %416 = vmatpush1.msra.mxu0 %v415
      %417 = vmatprep.subr.mxu0 0.0
      %v418 = vand.u32 %v318, 4294901760
      %v419 = vsub.f32 %v318, %v418
      %v420 = vand.u32 %v419, 4294901760
      %v421 = vsub.f32 %v419, %v420
      %v422 = vand.u32 %v421, 4294901760
      %423 = vmatpush1.msra.mxu0 %v422
      %424 = vmatprep.subr.mxu0 0.0
      %v425 = vand.u32 %v319, 4294901760
      %v426 = vsub.f32 %v319, %v425
      %v427 = vand.u32 %v426, 4294901760
      %v428 = vsub.f32 %v426, %v427
      %v429 = vand.u32 %v428, 4294901760
      %430 = vmatpush1.msra.mxu0 %v429
      %431 = vmatprep.subr.mxu0 0.0
      %432 = vmatpush1.msra.mxu0 0.0
      %433 = vmatprep.subr.mxu0 0.0
      %434 = vmatpush1.msra.mxu0 0.0
      %435 = vmatprep.subr.mxu0 0.0
      %436 = vmatpush1.msra.mxu0 0.0
      %437 = vmatprep.subr.mxu0 0.0
      %438 = vmatpush1.msra.mxu0 0.0
      %439 = vmatprep.subr.mxu0 0.0
      %440 = vmatpush1.msra.mxu0 0.0
      %441 = vmatprep.subr.mxu0 0.0
      %442 = vmatpush1.msra.mxu0 0.0
      %443 = vmatprep.subr.mxu0 0.0
      %444 = vmatpush1.msra.mxu0 0.0
      %445 = vmatprep.subr.mxu0 0.0
      %446 = vmatpush1.msra.mxu0 0.0
      %447 = vmatprep.subr.mxu0 0.0
      %448 = vmatpush1.msra.mxu0 0.0
      %449 = vmatprep.subr.mxu0 0.0
      %450 = vmatpush1.msra.mxu0 0.0
      %451 = vmatprep.subr.mxu0 0.0
      %452 = vmatpush1.msra.mxu0 0.0
      %453 = vmatprep.subr.mxu0 0.0
      %454 = vmatpush1.msra.mxu0 0.0
      %455 = vmatprep.subr.mxu0 0.0
      %456 = vmatpush1.msra.mxu0 0.0
      %457 = vmatprep.subr.mxu0 0.0
      %458 = vmatpush1.msra.mxu0 0.0
      %459 = vmatprep.subr.mxu0 0.0
      %460 = vmatpush1.msra.mxu0 0.0
      %461 = vmatprep.subr.mxu0 0.0
      %462 = vmatpush1.msra.mxu0 0.0
      %463 = vmatprep.subr.mxu0 0.0
      %464 = vmatpush1.msra.mxu0 0.0
      %465 = vmatprep.subr.mxu0 0.0
      %466 = vmatpush1.msra.mxu0 0.0
      %467 = vmatprep.subr.mxu0 0.0
      %468 = vmatpush1.msra.mxu0 0.0
      %469 = vmatprep.subr.mxu0 0.0
      %470 = vmatpush1.msra.mxu0 0.0
      %471 = vmatprep.subr.mxu0 0.0
      %472 = vmatpush1.msra.mxu0 0.0
      %473 = vmatprep.subr.mxu0 0.0
      %474 = vmatpush1.msra.mxu0 0.0
      %475 = vmatprep.subr.mxu0 0.0
      %476 = vmatpush1.msra.mxu0 0.0
      %477 = vmatprep.subr.mxu0 0.0
      %478 = vmatpush1.msra.mxu0 0.0
      %479 = vmatprep.subr.mxu0 0.0
      %480 = vmatpush1.msra.mxu0 0.0
      %481 = vmatprep.subr.mxu0 0.0
      %482 = vmatpush1.msra.mxu0 0.0
      %483 = vmatprep.subr.mxu0 0.0
      %484 = vmatpush1.msra.mxu0 0.0
      %485 = vmatprep.subr.mxu0 0.0
      %486 = vmatpush1.msra.mxu0 0.0
      %487 = vmatprep.mubr.f32.mxu0 0.0
      %v488 = vand.u32 %v322, 4294901760
      %489 = vmatmul.mubr.f32.gmra.mrb[0].mxu0 %v488
      %v490 = vpop.f32.mrb[0].mxu0
      %v491 = vadd.f32 %v400, %v490
      %v492 = vpop.f32.mrb[0].mxu0
      %493 = vdwg.mxu0
      %494 = vmatprep.subr.mxu0 0.0
      %v495 = vand.u32 %v316, 4294901760
      %v496 = vsub.f32 %v316, %v495
      %497 = vmatpush1.msra.mxu0 %v496
      %498 = vmatprep.subr.mxu0 0.0
      %v499 = vand.u32 %v317, 4294901760
      %v500 = vsub.f32 %v317, %v499
      %501 = vmatpush1.msra.mxu0 %v500
      %502 = vmatprep.subr.mxu0 0.0
      %v503 = vand.u32 %v318, 4294901760
      %v504 = vsub.f32 %v318, %v503
      %505 = vmatpush1.msra.mxu0 %v504
      %506 = vmatprep.subr.mxu0 0.0
      %v507 = vand.u32 %v319, 4294901760
      %v508 = vsub.f32 %v319, %v507
      %509 = vmatpush1.msra.mxu0 %v508
      %510 = vmatprep.subr.mxu0 0.0
      %511 = vmatpush1.msra.mxu0 0.0
      %512 = vmatprep.subr.mxu0 0.0
      %513 = vmatpush1.msra.mxu0 0.0
      %514 = vmatprep.subr.mxu0 0.0
      %515 = vmatpush1.msra.mxu0 0.0
      %516 = vmatprep.subr.mxu0 0.0
      %517 = vmatpush1.msra.mxu0 0.0
      %518 = vmatprep.subr.mxu0 0.0
      %519 = vmatpush1.msra.mxu0 0.0
      %520 = vmatprep.subr.mxu0 0.0
      %521 = vmatpush1.msra.mxu0 0.0
      %522 = vmatprep.subr.mxu0 0.0
      %523 = vmatpush1.msra.mxu0 0.0
      %524 = vmatprep.subr.mxu0 0.0
      %525 = vmatpush1.msra.mxu0 0.0
      %526 = vmatprep.subr.mxu0 0.0
      %527 = vmatpush1.msra.mxu0 0.0
      %528 = vmatprep.subr.mxu0 0.0
      %529 = vmatpush1.msra.mxu0 0.0
      %530 = vmatprep.subr.mxu0 0.0
      %531 = vmatpush1.msra.mxu0 0.0
      %532 = vmatprep.subr.mxu0 0.0
      %533 = vmatpush1.msra.mxu0 0.0
      %534 = vmatprep.subr.mxu0 0.0
      %535 = vmatpush1.msra.mxu0 0.0
      %536 = vmatprep.subr.mxu0 0.0
      %537 = vmatpush1.msra.mxu0 0.0
      %538 = vmatprep.subr.mxu0 0.0
      %539 = vmatpush1.msra.mxu0 0.0
      %540 = vmatprep.subr.mxu0 0.0
      %541 = vmatpush1.msra.mxu0 0.0
      %542 = vmatprep.subr.mxu0 0.0
      %543 = vmatpush1.msra.mxu0 0.0
      %544 = vmatprep.subr.mxu0 0.0
      %545 = vmatpush1.msra.mxu0 0.0
      %546 = vmatprep.subr.mxu0 0.0
      %547 = vmatpush1.msra.mxu0 0.0
      %548 = vmatprep.subr.mxu0 0.0
      %549 = vmatpush1.msra.mxu0 0.0
      %550 = vmatprep.subr.mxu0 0.0
      %551 = vmatpush1.msra.mxu0 0.0
      %552 = vmatprep.subr.mxu0 0.0
      %553 = vmatpush1.msra.mxu0 0.0
      %554 = vmatprep.subr.mxu0 0.0
      %555 = vmatpush1.msra.mxu0 0.0
      %556 = vmatprep.subr.mxu0 0.0
      %557 = vmatpush1.msra.mxu0 0.0
      %558 = vmatprep.subr.mxu0 0.0
      %559 = vmatpush1.msra.mxu0 0.0
      %560 = vmatprep.subr.mxu0 0.0
      %561 = vmatpush1.msra.mxu0 0.0
      %562 = vmatprep.subr.mxu0 0.0
      %563 = vmatpush1.msra.mxu0 0.0
      %564 = vmatprep.subr.mxu0 0.0
      %565 = vmatpush1.msra.mxu0 0.0
      %566 = vmatprep.mubr.f32.mxu0 0.0
      %v567 = vand.u32 %v322, 4294901760
      %v568 = vsub.f32 %v322, %v567
      %569 = vmatmul.mubr.f32.gmra.mrb[0].mxu0 %v568
      %v570 = vpop.f32.mrb[0].mxu0
      %v571 = vadd.f32 %v491, %v570
      %v572 = vpop.f32.mrb[0].mxu0
      %573 = vdwg.mxu0
      %574 = vmatprep.subr.mxu0 0.0
      %v575 = vand.u32 %v316, 4294901760
      %576 = vmatpush1.msra.mxu0 %v575
      %577 = vmatprep.subr.mxu0 0.0
      %v578 = vand.u32 %v317, 4294901760
      %579 = vmatpush1.msra.mxu0 %v578
      %580 = vmatprep.subr.mxu0 0.0
      %v581 = vand.u32 %v318, 4294901760
      %582 = vmatpush1.msra.mxu0 %v581
      %583 = vmatprep.subr.mxu0 0.0
      %v584 = vand.u32 %v319, 4294901760
      %585 = vmatpush1.msra.mxu0 %v584
      %586 = vmatprep.subr.mxu0 0.0
      %587 = vmatpush1.msra.mxu0 0.0
      %588 = vmatprep.subr.mxu0 0.0
      %589 = vmatpush1.msra.mxu0 0.0
      %590 = vmatprep.subr.mxu0 0.0
      %591 = vmatpush1.msra.mxu0 0.0
      %592 = vmatprep.subr.mxu0 0.0
      %593 = vmatpush1.msra.mxu0 0.0
      %594 = vmatprep.subr.mxu0 0.0
      %595 = vmatpush1.msra.mxu0 0.0
      %596 = vmatprep.subr.mxu0 0.0
      %597 = vmatpush1.msra.mxu0 0.0
      %598 = vmatprep.subr.mxu0 0.0
      %599 = vmatpush1.msra.mxu0 0.0
      %600 = vmatprep.subr.mxu0 0.0
      %601 = vmatpush1.msra.mxu0 0.0
      %602 = vmatprep.subr.mxu0 0.0
      %603 = vmatpush1.msra.mxu0 0.0
      %604 = vmatprep.subr.mxu0 0.0
      %605 = vmatpush1.msra.mxu0 0.0
      %606 = vmatprep.subr.mxu0 0.0
      %607 = vmatpush1.msra.mxu0 0.0
      %608 = vmatprep.subr.mxu0 0.0
      %609 = vmatpush1.msra.mxu0 0.0
      %610 = vmatprep.subr.mxu0 0.0
      %611 = vmatpush1.msra.mxu0 0.0
      %612 = vmatprep.subr.mxu0 0.0
      %613 = vmatpush1.msra.mxu0 0.0
      %614 = vmatprep.subr.mxu0 0.0
      %615 = vmatpush1.msra.mxu0 0.0
      %616 = vmatprep.subr.mxu0 0.0
      %617 = vmatpush1.msra.mxu0 0.0
      %618 = vmatprep.subr.mxu0 0.0
      %619 = vmatpush1.msra.mxu0 0.0
      %620 = vmatprep.subr.mxu0 0.0
      %621 = vmatpush1.msra.mxu0 0.0
      %622 = vmatprep.subr.mxu0 0.0
      %623 = vmatpush1.msra.mxu0 0.0
      %624 = vmatprep.subr.mxu0 0.0
      %625 = vmatpush1.msra.mxu0 0.0
      %626 = vmatprep.subr.mxu0 0.0
      %627 = vmatpush1.msra.mxu0 0.0
      %628 = vmatprep.subr.mxu0 0.0
      %629 = vmatpush1.msra.mxu0 0.0
      %630 = vmatprep.subr.mxu0 0.0
      %631 = vmatpush1.msra.mxu0 0.0
      %632 = vmatprep.subr.mxu0 0.0
      %633 = vmatpush1.msra.mxu0 0.0
      %634 = vmatprep.subr.mxu0 0.0
      %635 = vmatpush1.msra.mxu0 0.0
      %636 = vmatprep.subr.mxu0 0.0
      %637 = vmatpush1.msra.mxu0 0.0
      %638 = vmatprep.subr.mxu0 0.0
      %639 = vmatpush1.msra.mxu0 0.0
      %640 = vmatprep.subr.mxu0 0.0
      %641 = vmatpush1.msra.mxu0 0.0
      %642 = vmatprep.mubr.f32.mxu0 0.0
      %v643 = vand.u32 %v322, 4294901760
      %v644 = vsub.f32 %v322, %v643
      %v645 = vand.u32 %v644, 4294901760
      %646 = vmatmul.mubr.f32.gmra.mrb[0].mxu0 %v645
      %v647 = vpop.f32.mrb[0].mxu0
      %v648 = vadd.f32 %v571, %v647
      %v649 = vpop.f32.mrb[0].mxu0
      %650 = vdwg.mxu0
      %651 = vmatprep.subr.mxu0 0.0
      %v652 = vand.u32 %v316, 4294901760
      %v653 = vsub.f32 %v316, %v652
      %v654 = vand.u32 %v653, 4294901760
      %655 = vmatpush1.msra.mxu0 %v654
      %656 = vmatprep.subr.mxu0 0.0
      %v657 = vand.u32 %v317, 4294901760
      %v658 = vsub.f32 %v317, %v657
      %v659 = vand.u32 %v658, 4294901760
      %660 = vmatpush1.msra.mxu0 %v659
      %661 = vmatprep.subr.mxu0 0.0
      %v662 = vand.u32 %v318, 4294901760
      %v663 = vsub.f32 %v318, %v662
      %v664 = vand.u32 %v663, 4294901760
      %665 = vmatpush1.msra.mxu0 %v664
      %666 = vmatprep.subr.mxu0 0.0
      %v667 = vand.u32 %v319, 4294901760
      %v668 = vsub.f32 %v319, %v667
      %v669 = vand.u32 %v668, 4294901760
      %670 = vmatpush1.msra.mxu0 %v669
      %671 = vmatprep.subr.mxu0 0.0
      %672 = vmatpush1.msra.mxu0 0.0
      %673 = vmatprep.subr.mxu0 0.0
      %674 = vmatpush1.msra.mxu0 0.0
      %675 = vmatprep.subr.mxu0 0.0
      %676 = vmatpush1.msra.mxu0 0.0
      %677 = vmatprep.subr.mxu0 0.0
      %678 = vmatpush1.msra.mxu0 0.0
      %679 = vmatprep.subr.mxu0 0.0
      %680 = vmatpush1.msra.mxu0 0.0
      %681 = vmatprep.subr.mxu0 0.0
      %682 = vmatpush1.msra.mxu0 0.0
      %683 = vmatprep.subr.mxu0 0.0
      %684 = vmatpush1.msra.mxu0 0.0
      %685 = vmatprep.subr.mxu0 0.0
      %686 = vmatpush1.msra.mxu0 0.0
      %687 = vmatprep.subr.mxu0 0.0
      %688 = vmatpush1.msra.mxu0 0.0
      %689 = vmatprep.subr.mxu0 0.0
      %690 = vmatpush1.msra.mxu0 0.0
      %691 = vmatprep.subr.mxu0 0.0
      %692 = vmatpush1.msra.mxu0 0.0
      %693 = vmatprep.subr.mxu0 0.0
      %694 = vmatpush1.msra.mxu0 0.0
      %695 = vmatprep.subr.mxu0 0.0
      %696 = vmatpush1.msra.mxu0 0.0
      %697 = vmatprep.subr.mxu0 0.0
      %698 = vmatpush1.msra.mxu0 0.0
      %699 = vmatprep.subr.mxu0 0.0
      %700 = vmatpush1.msra.mxu0 0.0
      %701 = vmatprep.subr.mxu0 0.0
      %702 = vmatpush1.msra.mxu0 0.0
      %703 = vmatprep.subr.mxu0 0.0
      %704 = vmatpush1.msra.mxu0 0.0
      %705 = vmatprep.subr.mxu0 0.0
      %706 = vmatpush1.msra.mxu0 0.0
      %707 = vmatprep.subr.mxu0 0.0
      %708 = vmatpush1.msra.mxu0 0.0
      %709 = vmatprep.subr.mxu0 0.0
      %710 = vmatpush1.msra.mxu0 0.0
      %711 = vmatprep.subr.mxu0 0.0
      %712 = vmatpush1.msra.mxu0 0.0
      %713 = vmatprep.subr.mxu0 0.0
      %714 = vmatpush1.msra.mxu0 0.0
      %715 = vmatprep.subr.mxu0 0.0
      %716 = vmatpush1.msra.mxu0 0.0
      %717 = vmatprep.subr.mxu0 0.0
      %718 = vmatpush1.msra.mxu0 0.0
      %719 = vmatprep.subr.mxu0 0.0
      %720 = vmatpush1.msra.mxu0 0.0
      %721 = vmatprep.subr.mxu0 0.0
      %722 = vmatpush1.msra.mxu0 0.0
      %723 = vmatprep.subr.mxu0 0.0
      %724 = vmatpush1.msra.mxu0 0.0
      %725 = vmatprep.subr.mxu0 0.0
      %726 = vmatpush1.msra.mxu0 0.0
      %727 = vmatprep.mubr.f32.mxu0 0.0
      %v728 = vand.u32 %v322, 4294901760
      %729 = vmatmul.mubr.f32.gmra.mrb[0].mxu0 %v728
      %v730 = vpop.f32.mrb[0].mxu0
      %v731 = vadd.f32 %v648, %v730
      %v732 = vpop.f32.mrb[0].mxu0
      %733 = vdwg.mxu0
      %734 = vmatprep.subr.mxu0 0.0
      %v735 = vand.u32 %v316, 4294901760
      %736 = vmatpush1.msra.mxu0 %v735
      %737 = vmatprep.subr.mxu0 0.0
      %v738 = vand.u32 %v317, 4294901760
      %739 = vmatpush1.msra.mxu0 %v738
      %740 = vmatprep.subr.mxu0 0.0
      %v741 = vand.u32 %v318, 4294901760
      %742 = vmatpush1.msra.mxu0 %v741
      %743 = vmatprep.subr.mxu0 0.0
      %v744 = vand.u32 %v319, 4294901760
      %745 = vmatpush1.msra.mxu0 %v744
      %746 = vmatprep.subr.mxu0 0.0
      %747 = vmatpush1.msra.mxu0 0.0
      %748 = vmatprep.subr.mxu0 0.0
      %749 = vmatpush1.msra.mxu0 0.0
      %750 = vmatprep.subr.mxu0 0.0
      %751 = vmatpush1.msra.mxu0 0.0
      %752 = vmatprep.subr.mxu0 0.0
      %753 = vmatpush1.msra.mxu0 0.0
      %754 = vmatprep.subr.mxu0 0.0
      %755 = vmatpush1.msra.mxu0 0.0
      %756 = vmatprep.subr.mxu0 0.0
      %757 = vmatpush1.msra.mxu0 0.0
      %758 = vmatprep.subr.mxu0 0.0
      %759 = vmatpush1.msra.mxu0 0.0
      %760 = vmatprep.subr.mxu0 0.0
      %761 = vmatpush1.msra.mxu0 0.0
      %762 = vmatprep.subr.mxu0 0.0
      %763 = vmatpush1.msra.mxu0 0.0
      %764 = vmatprep.subr.mxu0 0.0
      %765 = vmatpush1.msra.mxu0 0.0
      %766 = vmatprep.subr.mxu0 0.0
      %767 = vmatpush1.msra.mxu0 0.0
      %768 = vmatprep.subr.mxu0 0.0
      %769 = vmatpush1.msra.mxu0 0.0
      %770 = vmatprep.subr.mxu0 0.0
      %771 = vmatpush1.msra.mxu0 0.0
      %772 = vmatprep.subr.mxu0 0.0
      %773 = vmatpush1.msra.mxu0 0.0
      %774 = vmatprep.subr.mxu0 0.0
      %775 = vmatpush1.msra.mxu0 0.0
      %776 = vmatprep.subr.mxu0 0.0
      %777 = vmatpush1.msra.mxu0 0.0
      %778 = vmatprep.subr.mxu0 0.0
      %779 = vmatpush1.msra.mxu0 0.0
      %780 = vmatprep.subr.mxu0 0.0
      %781 = vmatpush1.msra.mxu0 0.0
      %782 = vmatprep.subr.mxu0 0.0
      %783 = vmatpush1.msra.mxu0 0.0
      %784 = vmatprep.subr.mxu0 0.0
      %785 = vmatpush1.msra.mxu0 0.0
      %786 = vmatprep.subr.mxu0 0.0
      %787 = vmatpush1.msra.mxu0 0.0
      %788 = vmatprep.subr.mxu0 0.0
      %789 = vmatpush1.msra.mxu0 0.0
      %790 = vmatprep.subr.mxu0 0.0
      %791 = vmatpush1.msra.mxu0 0.0
      %792 = vmatprep.subr.mxu0 0.0
      %793 = vmatpush1.msra.mxu0 0.0
      %794 = vmatprep.subr.mxu0 0.0
      %795 = vmatpush1.msra.mxu0 0.0
      %796 = vmatprep.subr.mxu0 0.0
      %797 = vmatpush1.msra.mxu0 0.0
      %798 = vmatprep.subr.mxu0 0.0
      %799 = vmatpush1.msra.mxu0 0.0
      %800 = vmatprep.subr.mxu0 0.0
      %801 = vmatpush1.msra.mxu0 0.0
      %802 = vmatprep.mubr.f32.mxu0 0.0
      %v803 = vand.u32 %v322, 4294901760
      %804 = vmatmul.mubr.f32.gmra.mrb[0].mxu0 %v803
      %v805 = vpop.f32.mrb[0].mxu0
      %v806 = vadd.f32 %v731, %v805
      %v807 = vpop.f32.mrb[0].mxu0
      %808 = vdwg.mxu0
      %v809 = vsel %vm309, %v806, -1000.0
      %vm810 = vcmask 130048
      %v811 = vsel %vm810, %v809, -inf
      %812 = vmax.xlane.f32.xlu0 %v811
      %v813 = vpop.xlane.xlu0 %812
      %p814 = scmp.eq.s32.totalorder %s22, 0
      // Predicated region
      $region33: #{inner_product_decoder.2} parent=31 // pred_check
        %p815 = pneg %p814
      $region34: #{inner_product_decoder.2} parent=31 // pred_check_branch
        %817 = sbr.rel (%p815) target = $region36
      $region35: #{inner_product_decoder.2} parent=31 // pred_region
        %vm818 = vcmask 7168
        %819 = vst.msk [vmem:[%s294] sm:$0xff] %vm818, %v813
        %v820 = vsub.f32 %v809, %v813
        %v821 = vmul.f32 %v820, 1.442695
        %v822 = vpow.pop %v821
        %v823 = vsel %vm810, %v822, 0.0
        %824 = vadd.xlane.f32.xlu0 %v823
        %v825 = vpop.xlane.xlu0 %824
        %826 = vst.msk [vmem:[%s298] sm:$0xff] %vm818, %v825
      $region36: #{inner_product_decoder.2} parent=31 // pred_fallthru
        _
      %p827 = scmp.ne.s32.totalorder %s22, 0
      // Predicated region
      $region37: #{inner_product_decoder.2} parent=31 // pred_check
        %p828 = pneg %p827
      $region38: #{inner_product_decoder.2} parent=31 // pred_check_branch
        %830 = sbr.rel (%p828) target = $region40
      $region39: #{inner_product_decoder.2} parent=31 // pred_region
        %v831 = vld [vmem:[%s294] sm:$0xff]
        %v832 = vmax.f32 %v831, %v813
        %v833 = vld [vmem:[%s298] sm:$0xff]
        %v834 = vsub.f32 %v831, %v832
        %v835 = vmul.f32 %v834, 1.442695
        %v836 = vpow.pop %v835
        %v837 = vmul.f32 %v833, %v836
        %839 = vset.pattern.permute.xlu0 0
        %840 = vperm.xlu0 %839, %v832
        %v841 = vpop.permute.xlu0 %840
        %v843 = vsub.f32 %v809, %v841
        %v844 = vmul.f32 %v843, 1.442695
        %v845 = vpow.pop %v844
        %v846 = vsel %vm810, %v845, 0.0
        %847 = vadd.xlane.f32.xlu0 %v846
        %v848 = vpop.xlane.xlu0 %847
        %v849 = vadd.f32 %v837, %v848
        %vm850 = vcmask 7168
        %851 = vst.msk [vmem:[%s298] sm:$0xff] %vm850, %v849
        %852 = vst.msk [vmem:[%s294] sm:$0xff] %vm850, %v832
      $region40: #{inner_product_decoder.2} parent=31 // pred_fallthru
        _
      %p853 = scmp.lt.s32.totalorder %s21, 1
      %s854 = scalar_select %p853, %s21, 1
      %s855 = smul.addr %s854, 8
      %s856 = scalar_lea.vmem %s3, %s855
      %p857 = scmp.lt.s32.totalorder %s21, 1
      %s858 = scalar_select %p857, %s21, 1
      %s859 = smul.addr %s858, 8
      %s860 = scalar_lea.vmem %s4, %s859
      %p861 = scmp.lt.s32.totalorder %s21, 1
      %s862 = scalar_select %p861, %s21, 1
      %p863 = scmp.lt.s32.totalorder %s22, 0
      %s864 = scalar_select %p863, %s22, 0
      %s865 = sadd.s32 %s864, %s862
      %s866 = smul.addr %s865, 2
      %s867 = scalar_lea.vmem %s5, %s866
      // Predicated region
      $region41: #{inner_product_decoder.2} parent=31 // pred_check
        %p868 = pneg %p127
      $region42: #{inner_product_decoder.2} parent=31 // pred_check_branch
        %870 = sbr.rel (%p868) target = $region44
      $region43: #{inner_product_decoder.2} parent=31 // pred_region
        _
      $region44: #{inner_product_decoder.2} parent=31 // pred_fallthru
        _
      // Predicated region
      $region45: #{inner_product_decoder.2} parent=31 // pred_check
        %p871 = pneg %p153
      $region46: #{inner_product_decoder.2} parent=31 // pred_check_branch
        %873 = sbr.rel (%p871) target = $region48
      $region47: #{inner_product_decoder.2} parent=31 // pred_region
        _
      $region48: #{inner_product_decoder.2} parent=31 // pred_fallthru
        _
      // Predicated region
      $region49: #{inner_product_decoder.2} parent=31 // pred_check
        %p874 = pneg %p181
      $region50: #{inner_product_decoder.2} parent=31 // pred_check_branch
        %876 = sbr.rel (%p874) target = $region52
      $region51: #{inner_product_decoder.2} parent=31 // pred_region
        _
      $region52: #{inner_product_decoder.2} parent=31 // pred_fallthru
        _
    $region32: #{inner_product_decoder.2} parent=5 // pred_fallthru
      _
    %p877 = scmp.le.s32.totalorder 2, %s12
    // Predicated region
    $region53: #{inner_product_decoder.2} parent=5 // pred_check
      %p878 = pneg %p877
    $region54: #{inner_product_decoder.2} parent=5 // pred_check_branch
      %880 = sbr.rel (%p878) target = $region56
    $region55: #{inner_product_decoder.2} parent=5 // pred_region
      %s881 = ssub.s32 %s12, 2
      // Predicated region
      $region57: #{inner_product_decoder.2} parent=55 // pred_check
        %p882 = pneg %p133
      $region58: #{inner_product_decoder.2} parent=55 // pred_check_branch
        %884 = sbr.rel (%p882) target = $region60
      $region59: #{inner_product_decoder.2} parent=55 // pred_region
        %p885 = scmp.lt.s32.totalorder %s23, 1
        %s886 = scalar_select %p885, %s23, 1
        %s887 = smul.addr %s886, 8
        %s888 = scalar_lea.vmem %s3, %s887
      $region60: #{inner_product_decoder.2} parent=55 // pred_fallthru
        _
      // Predicated region
      $region61: #{inner_product_decoder.2} parent=55 // pred_check
        %p889 = pneg %p159
      $region62: #{inner_product_decoder.2} parent=55 // pred_check_branch
        %891 = sbr.rel (%p889) target = $region64
      $region63: #{inner_product_decoder.2} parent=55 // pred_region
        %p892 = scmp.lt.s32.totalorder %s23, 1
        %s893 = scalar_select %p892, %s23, 1
        %s894 = smul.addr %s893, 8
        %s895 = scalar_lea.vmem %s4, %s894
      $region64: #{inner_product_decoder.2} parent=55 // pred_fallthru
        _
      // Predicated region
      $region65: #{inner_product_decoder.2} parent=55 // pred_check
        %p896 = pneg %p187
      $region66: #{inner_product_decoder.2} parent=55 // pred_check_branch
        %898 = sbr.rel (%p896) target = $region68
      $region67: #{inner_product_decoder.2} parent=55 // pred_region
        %p899 = scmp.lt.s32.totalorder %s23, 1
        %s900 = scalar_select %p899, %s23, 1
        %p901 = scmp.lt.s32.totalorder %s24, 0
        %s902 = scalar_select %p901, %s24, 0
        %s903 = sadd.s32 %s902, %s900
        %s904 = smul.addr %s903, 2
        %s905 = scalar_lea.vmem %s5, %s904
      $region68: #{inner_product_decoder.2} parent=55 // pred_fallthru
        _
    $region56: #{inner_product_decoder.2} parent=5 // pred_fallthru
      _
  $region6: #{inner_product_decoder.2} parent=0 // loop_footer
    %s16 = sadd.s32 1, %s12
  $region7: #{inner_product_decoder.2} parent=0 // loop_footer_branch
    %11 = sbr.rel target = $region3
  $region8: #{inner_product_decoder.2} parent=0 // loop_exit
    _

// kernel: inner_product_decoder.3
$region0: #{inner_product_decoder.3}
  #allocation0 [shape = 'u32[]', space=smem, size = 0x4, offset = 0x4, fixed_abs, tag = 'smem constant byte address 0x4 - core index']
  #allocation1 [shape = 'u32[144,128]{1,0:T(1,128)}', space=vmem, size = 0x12000, scoped, tag = 'internal scratch']
  %s0 = inlined_call_operand.vmem [shape: f32[16,32], index: 0, kind: input, shape index: {}]
  %s1 = inlined_call_operand.vmem [shape: f32[32,16], index: 1, kind: input, shape index: {}]
  %s2 = inlined_call_operand.vmem [shape: s8[16,16], index: 2, kind: input, shape index: {}]
  %s3 = inlined_call_operand.vmem [shape: f32[16,1], index: 3, kind: input, shape index: {}]
  %s4 = inlined_call_operand.vmem [shape: f32[16,1], index: 4, kind: input, shape index: {}]
  %s5 = inlined_call_operand.hbm [shape: f32[16,16], index: 5, kind: output, shape index: {}]
  %s6 = sld [smem:[#allocation0]]
  $region53: #{inner_product_decoder.3} parent=0
    _
  %s8 = ssub.s32 1, %s6
  %s9 = scalar_select 0, %s8, %s6
  $region1: #{inner_product_decoder.3} parent=0
    #allocation2 [shape = 'u8[8192]{0}', space=vmem, size = 0x2000, scoped, tag = 'output window, operand 0']
    #allocation3 [shape = 's32[2]{0}', space=sflag, size = 0x8, scoped, tag = 'scoped memory for inner_product_decoder.3']
    %10 = vsyncpa [#allocation3], 0
    %s11 = scalar_lea.sflag [#allocation3], 1
    %12 = vsyncpa %s11, 0
    loop: start=0, step=1, limit=4
    $region2: #{inner_product_decoder.3} parent=1 // loop_pre_header
      _
    $region3: #{inner_product_decoder.3} parent=1 // loop_header
      %s14 = sphi 0, %s18
      %p15 = scmp.ge.s32.totalorder %s14, 4
      %s21 = sphi 0, %s33
      %s22 = sphi 0, %s29
      %s23 = sphi 0, %s21
      %s24 = sphi 0, %s22
      %s25 = sphi 0, %s23
      %s26 = sphi 0, %s24
      %s36 = sphi 0, %s38
      %s39 = sphi 0, %s36
      %s40 = sphi 0, %s39
      %s56 = sphi 0, %s40
      %s62 = sphi 0, %s64
      %s65 = sphi 0, %s62
      %s66 = sphi 0, %s65
      %s82 = sphi 0, %s66
      %s90 = sphi 0, %s92
      %s93 = sphi 0, %s90
      %s94 = sphi 0, %s93
      %s110 = sphi 0, %s94
      %s116 = sphi 0, %s118
      %s119 = sphi 0, %s116
      %s120 = sphi 0, %s119
      %s136 = sphi 0, %s120
      %s142 = sphi 0, %s144
      %s145 = sphi 0, %s142
      %s146 = sphi 0, %s145
      %s162 = sphi 0, %s146
      %s170 = sphi 0, %s172
      %s173 = sphi 0, %s170
      %s174 = sphi 0, %s173
      %s190 = sphi 0, %s174
    $region4: #{inner_product_decoder.3} parent=1 // loop_header_branch
      %17 = sbr.rel (%p15) target = $region8
    $region5: #{inner_product_decoder.3} parent=1 // loop_body
      %s19 = ssub.s32 %s14, 1
      %s20 = ssub.s32 %s14, 2
      %s27 = sadd.s32 1, %s22
      %p28 = scmp.ge.s32.totalorder %s27, 1
      %s29 = scalar_select %p28, 0, %s27
      %s30 = sadd.s32 1, %s21
      %s31 = scalar_select %p28, %s30, %s21
      %p32 = scmp.ge.s32.totalorder %s31, 2
      %s33 = scalar_select %p32, 0, %s31
      %s34 = ssub.s32 %s21, %s33
      %p35 = scmp.eq.s32.totalorder %s34, 0
      %s37 = sadd.s32 %s36, 1
      %s38 = scalar_select %p35, %s36, %s37
      %p41 = pneg %p35
      %p42 = scmp.eq.s32.totalorder %s14, 1
      %p43 = por %p41, %p42
      %p44 = scmp.ne.s32.totalorder %s36, %s39
      %p45 = scmp.eq.s32.totalorder %s14, 0
      %p46 = por %p44, %p45
      %p47 = scmp.ne.s32.totalorder %s36, %s39
      %p48 = scmp.eq.s32.totalorder %s19, 1
      %p49 = por %p47, %p48
      %p50 = scmp.ne.s32.totalorder %s39, %s40
      %p51 = scmp.eq.s32.totalorder %s19, 0
      %p52 = por %p50, %p51
      %p53 = scmp.ne.s32.totalorder %s39, %s40
      %p54 = scmp.eq.s32.totalorder %s20, 1
      %p55 = por %p53, %p54
      %p57 = scmp.ne.s32.totalorder %s40, %s56
      %p58 = scmp.eq.s32.totalorder %s20, 0
      %p59 = por %p57, %p58
      %s60 = ssub.s32 %s22, %s29
      %p61 = scmp.eq.s32.totalorder %s60, 0
      %s63 = sadd.s32 %s62, 1
      %s64 = scalar_select %p61, %s62, %s63
      %p67 = pneg %p61
      %p68 = scmp.eq.s32.totalorder %s14, 1
      %p69 = por %p67, %p68
      %p70 = scmp.ne.s32.totalorder %s62, %s65
      %p71 = scmp.eq.s32.totalorder %s14, 0
      %p72 = por %p70, %p71
      %p73 = scmp.ne.s32.totalorder %s62, %s65
      %p74 = scmp.eq.s32.totalorder %s19, 1
      %p75 = por %p73, %p74
      %p76 = scmp.ne.s32.totalorder %s65, %s66
      %p77 = scmp.eq.s32.totalorder %s19, 0
      %p78 = por %p76, %p77
      %p79 = scmp.ne.s32.totalorder %s65, %s66
      %p80 = scmp.eq.s32.totalorder %s20, 1
      %p81 = por %p79, %p80
      %p83 = scmp.ne.s32.totalorder %s66, %s82
      %p84 = scmp.eq.s32.totalorder %s20, 0
      %p85 = por %p83, %p84
      %s86 = ssub.s32 %s21, %s33
      %s87 = ssub.s32 %s22, %s29
      %s88 = sor.u32 %s86, %s87
      %p89 = scmp.eq.s32.totalorder %s88, 0
      %s91 = sadd.s32 %s90, 1
      %s92 = scalar_select %p89, %s90, %s91
      %p95 = pneg %p89
      %p96 = scmp.eq.s32.totalorder %s14, 1
      %p97 = por %p95, %p96
      %p98 = scmp.ne.s32.totalorder %s90, %s93
      %p99 = scmp.eq.s32.totalorder %s14, 0
      %p100 = por %p98, %p99
      %p101 = scmp.ne.s32.totalorder %s90, %s93
      %p102 = scmp.eq.s32.totalorder %s19, 1
      %p103 = por %p101, %p102
      %p104 = scmp.ne.s32.totalorder %s93, %s94
      %p105 = scmp.eq.s32.totalorder %s19, 0
      %p106 = por %p104, %p105
      %p107 = scmp.ne.s32.totalorder %s93, %s94
      %p108 = scmp.eq.s32.totalorder %s20, 1
      %p109 = por %p107, %p108
      %p111 = scmp.ne.s32.totalorder %s94, %s110
      %p112 = scmp.eq.s32.totalorder %s20, 0
      %p113 = por %p111, %p112
      %s114 = ssub.s32 %s21, %s33
      %p115 = scmp.eq.s32.totalorder %s114, 0
      %s117 = sadd.s32 %s116, 1
      %s118 = scalar_select %p115, %s116, %s117
      %p121 = pneg %p115
      %p122 = scmp.eq.s32.totalorder %s14, 1
      %p123 = por %p121, %p122
      %p124 = scmp.ne.s32.totalorder %s116, %s119
      %p125 = scmp.eq.s32.totalorder %s14, 0
      %p126 = por %p124, %p125
      %p127 = scmp.ne.s32.totalorder %s116, %s119
      %p128 = scmp.eq.s32.totalorder %s19, 1
      %p129 = por %p127, %p128
      %p130 = scmp.ne.s32.totalorder %s119, %s120
      %p131 = scmp.eq.s32.totalorder %s19, 0
      %p132 = por %p130, %p131
      %p133 = scmp.ne.s32.totalorder %s119, %s120
      %p134 = scmp.eq.s32.totalorder %s20, 1
      %p135 = por %p133, %p134
      %p137 = scmp.ne.s32.totalorder %s120, %s136
      %p138 = scmp.eq.s32.totalorder %s20, 0
      %p139 = por %p137, %p138
      %s140 = ssub.s32 %s21, %s33
      %p141 = scmp.eq.s32.totalorder %s140, 0
      %s143 = sadd.s32 %s142, 1
      %s144 = scalar_select %p141, %s142, %s143
      %p147 = pneg %p141
      %p148 = scmp.eq.s32.totalorder %s14, 1
      %p149 = por %p147, %p148
      %p150 = scmp.ne.s32.totalorder %s142, %s145
      %p151 = scmp.eq.s32.totalorder %s14, 0
      %p152 = por %p150, %p151
      %p153 = scmp.ne.s32.totalorder %s142, %s145
      %p154 = scmp.eq.s32.totalorder %s19, 1
      %p155 = por %p153, %p154
      %p156 = scmp.ne.s32.totalorder %s145, %s146
      %p157 = scmp.eq.s32.totalorder %s19, 0
      %p158 = por %p156, %p157
      %p159 = scmp.ne.s32.totalorder %s145, %s146
      %p160 = scmp.eq.s32.totalorder %s20, 1
      %p161 = por %p159, %p160
      %p163 = scmp.ne.s32.totalorder %s146, %s162
      %p164 = scmp.eq.s32.totalorder %s20, 0
      %p165 = por %p163, %p164
      %s166 = ssub.s32 %s21, %s33
      %s167 = ssub.s32 %s22, %s29
      %s168 = sor.u32 %s166, %s167
      %p169 = scmp.eq.s32.totalorder %s168, 0
      %s171 = sadd.s32 %s170, 1
      %s172 = scalar_select %p169, %s170, %s171
      %p175 = pneg %p169
      %p176 = scmp.eq.s32.totalorder %s14, 1
      %p177 = por %p175, %p176
      %p178 = scmp.ne.s32.totalorder %s170, %s173
      %p179 = scmp.eq.s32.totalorder %s14, 0
      %p180 = por %p178, %p179
      %p181 = scmp.ne.s32.totalorder %s170, %s173
      %p182 = scmp.eq.s32.totalorder %s19, 1
      %p183 = por %p181, %p182
      %p184 = scmp.ne.s32.totalorder %s173, %s174
      %p185 = scmp.eq.s32.totalorder %s19, 0
      %p186 = por %p184, %p185
      %p187 = scmp.ne.s32.totalorder %s173, %s174
      %p188 = scmp.eq.s32.totalorder %s20, 1
      %p189 = por %p187, %p188
      %p191 = scmp.ne.s32.totalorder %s174, %s190
      %p192 = scmp.eq.s32.totalorder %s20, 0
      %p193 = por %p191, %p192
      %p194 = scmp.le.s32.totalorder 1, %s14
      %p195 = scmp.lt.s32.totalorder %s14, 3
      %p196 = pnand %p194, %p195
      %p197 = pneg %p196
      // Predicated region
      $region9: #{inner_product_decoder.3} parent=5 // pred_check
        _
      $region10: #{inner_product_decoder.3} parent=5 // pred_check_branch
        %199 = sbr.rel (%p196) target = $region12
      $region11: #{inner_product_decoder.3} parent=5 // pred_region
        %s200 = ssub.s32 %s14, 1
        // Predicated region
        $region13: #{inner_product_decoder.3} parent=11 // pred_check
          %p201 = pneg %p78
        $region14: #{inner_product_decoder.3} parent=11 // pred_check_branch
          %203 = sbr.rel (%p201) target = $region16
        $region15: #{inner_product_decoder.3} parent=11 // pred_region
          %p204 = scmp.lt.s32.totalorder %s24, 0
          %s205 = scalar_select %p204, %s24, 0
          %s206 = smul.addr %s205, 8
          %s207 = scalar_lea.vmem %s1, %s206
        $region16: #{inner_product_decoder.3} parent=11 // pred_fallthru
          _
      $region12: #{inner_product_decoder.3} parent=5 // pred_fallthru
        _
      %p208 = scmp.lt.s32.totalorder %s14, 2
      // Predicated region
      $region17: #{inner_product_decoder.3} parent=5 // pred_check
        %p209 = pneg %p208
      $region18: #{inner_product_decoder.3} parent=5 // pred_check_branch
        %211 = sbr.rel (%p209) target = $region20
      $region19: #{inner_product_decoder.3} parent=5 // pred_region
        // Predicated region
        $region21: #{inner_product_decoder.3} parent=19 // pred_check
          %p212 = pneg %p46
        $region22: #{inner_product_decoder.3} parent=19 // pred_check_branch
          %214 = sbr.rel (%p212) target = $region24
        $region23: #{inner_product_decoder.3} parent=19 // pred_region
          %p215 = scmp.lt.s32.totalorder %s21, 1
          %s216 = scalar_select %p215, %s21, 1
          %s217 = smul.addr %s216, 8
          %s218 = scalar_lea.vmem %s0, %s217
        $region24: #{inner_product_decoder.3} parent=19 // pred_fallthru
          _
        // Predicated region
        $region25: #{inner_product_decoder.3} parent=19 // pred_check
          %p219 = pneg %p100
        $region26: #{inner_product_decoder.3} parent=19 // pred_check_branch
          %221 = sbr.rel (%p219) target = $region28
        $region27: #{inner_product_decoder.3} parent=19 // pred_region
          %p222 = scmp.lt.s32.totalorder %s21, 1
          %s223 = scalar_select %p222, %s21, 1
          %p224 = scmp.lt.s32.totalorder %s22, 0
          %s225 = scalar_select %p224, %s22, 0
          %s226 = sadd.s32 %s225, %s223
          %s227 = smul.addr %s226, 2
          %s228 = scalar_lea.vmem %s2, %s227
        $region28: #{inner_product_decoder.3} parent=19 // pred_fallthru
          _
        // Predicated region
        $region29: #{inner_product_decoder.3} parent=19 // pred_check
          %p229 = pneg %p126
        $region30: #{inner_product_decoder.3} parent=19 // pred_check_branch
          %231 = sbr.rel (%p229) target = $region32
        $region31: #{inner_product_decoder.3} parent=19 // pred_region
          %p232 = scmp.lt.s32.totalorder %s21, 1
          %s233 = scalar_select %p232, %s21, 1
          %s234 = smul.addr %s233, 8
          %s235 = scalar_lea.vmem %s3, %s234
        $region32: #{inner_product_decoder.3} parent=19 // pred_fallthru
          _
        // Predicated region
        $region33: #{inner_product_decoder.3} parent=19 // pred_check
          %p236 = pneg %p152
        $region34: #{inner_product_decoder.3} parent=19 // pred_check_branch
          %238 = sbr.rel (%p236) target = $region36
        $region35: #{inner_product_decoder.3} parent=19 // pred_region
          %p239 = scmp.lt.s32.totalorder %s21, 1
          %s240 = scalar_select %p239, %s21, 1
          %s241 = smul.addr %s240, 8
          %s242 = scalar_lea.vmem %s4, %s241
        $region36: #{inner_product_decoder.3} parent=19 // pred_fallthru
          _
      $region20: #{inner_product_decoder.3} parent=5 // pred_fallthru
        _
      %p243 = scmp.le.s32.totalorder 1, %s14
      %p244 = scmp.lt.s32.totalorder %s14, 3
      %p245 = pnand %p243, %p244
      %p246 = pneg %p245
      // Predicated region
      $region37: #{inner_product_decoder.3} parent=5 // pred_check
        _
      $region38: #{inner_product_decoder.3} parent=5 // pred_check_branch
        %248 = sbr.rel (%p245) target = $region40
      $region39: #{inner_product_decoder.3} parent=5 // pred_region
        %s249 = ssub.s32 %s14, 1
        %p250 = scmp.lt.s32.totalorder %s23, 1
        %s251 = scalar_select %p250, %s23, 1
        %s252 = smul.addr %s251, 8
        %s253 = scalar_lea.vmem %s0, %s252
        %p254 = pneg %p52
        %p255 = pneg %p49
        %p256 = scmp.lt.s32.totalorder %s24, 0
        %s257 = scalar_select %p256, %s24, 0
        %s258 = smul.addr %s257, 8
        %s259 = scalar_lea.vmem %s1, %s258
        %p260 = pneg %p78
        %p261 = pneg %p75
        %p262 = scmp.lt.s32.totalorder %s23, 1
        %s263 = scalar_select %p262, %s23, 1
        %p264 = scmp.lt.s32.totalorder %s24, 0
        %s265 = scalar_select %p264, %s24, 0
        %s266 = sadd.s32 %s265, %s263
        %s267 = smul.addr %s266, 2
        %s268 = scalar_lea.vmem %s2, %s267
        %p269 = pneg %p106
        %p270 = pneg %p103
        %p271 = scmp.lt.s32.totalorder %s23, 1
        %s272 = scalar_select %p271, %s23, 1
        %s273 = smul.addr %s272, 8
        %s274 = scalar_lea.vmem %s3, %s273
        %p275 = pneg %p132
        %p276 = pneg %p129
        %p277 = scmp.lt.s32.totalorder %s23, 1
        %s278 = scalar_select %p277, %s23, 1
        %s279 = smul.addr %s278, 8
        %s280 = scalar_lea.vmem %s4, %s279
        %p281 = pneg %p158
        %p282 = pneg %p155
        %p283 = pneg %p186
        %p284 = pneg %p183
        %s285 = sand.u32 %s173, 1
        %s286 = scalar_lea.sflag [#allocation3], %s285
        %s287 = sand.u32 %s173, 1
        %s288 = smul.addr %s287, 8
        %s289 = scalar_lea.vmem [#allocation2], %s288
        %p290 = scmp.lt.s32.totalorder %s23, 1
        %s291 = scalar_select %p290, %s23, 1
        %s292 = smul.addr %s291, 8
        %s293 = scalar_lea.vmem %s0, %s292
        %p294 = scmp.lt.s32.totalorder %s24, 0
        %s295 = scalar_select %p294, %s24, 0
        %s296 = smul.addr %s295, 8
        %s297 = scalar_lea.vmem %s1, %s296
        %p298 = scmp.lt.s32.totalorder %s23, 1
        %s299 = scalar_select %p298, %s23, 1
        %p300 = scmp.lt.s32.totalorder %s24, 0
        %s301 = scalar_select %p300, %s24, 0
        %s302 = sadd.s32 %s301, %s299
        %s303 = smul.addr %s302, 2
        %s304 = scalar_lea.vmem %s2, %s303
        %p305 = scmp.lt.s32.totalorder %s23, 1
        %s306 = scalar_select %p305, %s23, 1
        %s307 = smul.addr %s306, 8
        %s308 = scalar_lea.vmem %s3, %s307
        %p309 = scmp.lt.s32.totalorder %s23, 1
        %s310 = scalar_select %p309, %s23, 1
        %s311 = smul.addr %s310, 8
        %s312 = scalar_lea.vmem %s4, %s311
        %v315 = vld [vmem:[%s304] sm:$0x3]
        %vm316 = vnez %v315
        %v317 = vld [vmem:[%s293] sm:$0xff]
        %v318 = vld [vmem:[%s297] sm:$0xff]
        %v319 = vld [vmem:[%s297 + $0x8] sm:$0xff]
        %v320 = vld [vmem:[%s297 + $0x10] sm:$0xff]
        %v321 = vld [vmem:[%s297 + $0x18] sm:$0xff]
        %vm322 = vcmask 261120
        %v324 = vsel %vm322, %v317, 0
        %326 = vmatprep.subr.mxu0 0.0
        %v327 = vand.u32 %v318, 4294901760
        %328 = vmatpush1.msra.mxu0 %v327
        %329 = vmatprep.subr.mxu0 0.0
        %v330 = vand.u32 %v319, 4294901760
        %331 = vmatpush1.msra.mxu0 %v330
        %332 = vmatprep.subr.mxu0 0.0
        %v333 = vand.u32 %v320, 4294901760
        %334 = vmatpush1.msra.mxu0 %v333
        %335 = vmatprep.subr.mxu0 0.0
        %v336 = vand.u32 %v321, 4294901760
        %337 = vmatpush1.msra.mxu0 %v336
        %338 = vmatprep.subr.mxu0 0.0
        %339 = vmatpush1.msra.mxu0 0.0
        %340 = vmatprep.subr.mxu0 0.0
        %341 = vmatpush1.msra.mxu0 0.0
        %342 = vmatprep.subr.mxu0 0.0
        %343 = vmatpush1.msra.mxu0 0.0
        %344 = vmatprep.subr.mxu0 0.0
        %345 = vmatpush1.msra.mxu0 0.0
        %346 = vmatprep.subr.mxu0 0.0
        %347 = vmatpush1.msra.mxu0 0.0
        %348 = vmatprep.subr.mxu0 0.0
        %349 = vmatpush1.msra.mxu0 0.0
        %350 = vmatprep.subr.mxu0 0.0
        %351 = vmatpush1.msra.mxu0 0.0
        %352 = vmatprep.subr.mxu0 0.0
        %353 = vmatpush1.msra.mxu0 0.0
        %354 = vmatprep.subr.mxu0 0.0
        %355 = vmatpush1.msra.mxu0 0.0
        %356 = vmatprep.subr.mxu0 0.0
        %357 = vmatpush1.msra.mxu0 0.0
        %358 = vmatprep.subr.mxu0 0.0
        %359 = vmatpush1.msra.mxu0 0.0
        %360 = vmatprep.subr.mxu0 0.0
        %361 = vmatpush1.msra.mxu0 0.0
        %362 = vmatprep.subr.mxu0 0.0
        %363 = vmatpush1.msra.mxu0 0.0
        %364 = vmatprep.subr.mxu0 0.0
        %365 = vmatpush1.msra.mxu0 0.0
        %366 = vmatprep.subr.mxu0 0.0
        %367 = vmatpush1.msra.mxu0 0.0
        %368 = vmatprep.subr.mxu0 0.0
        %369 = vmatpush1.msra.mxu0 0.0
        %370 = vmatprep.subr.mxu0 0.0
        %371 = vmatpush1.msra.mxu0 0.0
        %372 = vmatprep.subr.mxu0 0.0
        %373 = vmatpush1.msra.mxu0 0.0
        %374 = vmatprep.subr.mxu0 0.0
        %375 = vmatpush1.msra.mxu0 0.0
        %376 = vmatprep.subr.mxu0 0.0
        %377 = vmatpush1.msra.mxu0 0.0
        %378 = vmatprep.subr.mxu0 0.0
        %379 = vmatpush1.msra.mxu0 0.0
        %380 = vmatprep.subr.mxu0 0.0
        %381 = vmatpush1.msra.mxu0 0.0
        %382 = vmatprep.subr.mxu0 0.0
        %383 = vmatpush1.msra.mxu0 0.0
        %384 = vmatprep.subr.mxu0 0.0
        %385 = vmatpush1.msra.mxu0 0.0
        %386 = vmatprep.subr.mxu0 0.0
        %387 = vmatpush1.msra.mxu0 0.0
        %388 = vmatprep.subr.mxu0 0.0
        %389 = vmatpush1.msra.mxu0 0.0
        %390 = vmatprep.subr.mxu0 0.0
        %391 = vmatpush1.msra.mxu0 0.0
        %392 = vmatprep.subr.mxu0 0.0
        %393 = vmatpush1.msra.mxu0 0.0
        %394 = vmatprep.mubr.f32.mxu0 0.0
        %v395 = vand.u32 %v324, 4294901760
        %v396 = vsub.f32 %v324, %v395
        %v397 = vand.u32 %v396, 4294901760
        %v398 = vsub.f32 %v396, %v397
        %v399 = vand.u32 %v398, 4294901760
        %400 = vmatmul.mubr.f32.gmra.mrb[0].mxu0 %v399
        %v401 = vpop.f32.mrb[0].mxu0
        %v402 = vadd.f32 0.0, %v401
        %v403 = vpop.f32.mrb[0].mxu0
        %404 = vdwg.mxu0
        %405 = vmatprep.subr.mxu0 0.0
        %v406 = vand.u32 %v318, 4294901760
        %v407 = vsub.f32 %v318, %v406
        %v408 = vand.u32 %v407, 4294901760
        %v409 = vsub.f32 %v407, %v408
        %v410 = vand.u32 %v409, 4294901760
        %411 = vmatpush1.msra.mxu0 %v410
        %412 = vmatprep.subr.mxu0 0.0
        %v413 = vand.u32 %v319, 4294901760
        %v414 = vsub.f32 %v319, %v413
        %v415 = vand.u32 %v414, 4294901760
        %v416 = vsub.f32 %v414, %v415
        %v417 = vand.u32 %v416, 4294901760
        %418 = vmatpush1.msra.mxu0 %v417
        %419 = vmatprep.subr.mxu0 0.0
        %v420 = vand.u32 %v320, 4294901760
        %v421 = vsub.f32 %v320, %v420
        %v422 = vand.u32 %v421, 4294901760
        %v423 = vsub.f32 %v421, %v422
        %v424 = vand.u32 %v423, 4294901760
        %425 = vmatpush1.msra.mxu0 %v424
        %426 = vmatprep.subr.mxu0 0.0
        %v427 = vand.u32 %v321, 4294901760
        %v428 = vsub.f32 %v321, %v427
        %v429 = vand.u32 %v428, 4294901760
        %v430 = vsub.f32 %v428, %v429
        %v431 = vand.u32 %v430, 4294901760
        %432 = vmatpush1.msra.mxu0 %v431
        %433 = vmatprep.subr.mxu0 0.0
        %434 = vmatpush1.msra.mxu0 0.0
        %435 = vmatprep.subr.mxu0 0.0
        %436 = vmatpush1.msra.mxu0 0.0
        %437 = vmatprep.subr.mxu0 0.0
        %438 = vmatpush1.msra.mxu0 0.0
        %439 = vmatprep.subr.mxu0 0.0
        %440 = vmatpush1.msra.mxu0 0.0
        %441 = vmatprep.subr.mxu0 0.0
        %442 = vmatpush1.msra.mxu0 0.0
        %443 = vmatprep.subr.mxu0 0.0
        %444 = vmatpush1.msra.mxu0 0.0
        %445 = vmatprep.subr.mxu0 0.0
        %446 = vmatpush1.msra.mxu0 0.0
        %447 = vmatprep.subr.mxu0 0.0
        %448 = vmatpush1.msra.mxu0 0.0
        %449 = vmatprep.subr.mxu0 0.0
        %450 = vmatpush1.msra.mxu0 0.0
        %451 = vmatprep.subr.mxu0 0.0
        %452 = vmatpush1.msra.mxu0 0.0
        %453 = vmatprep.subr.mxu0 0.0
        %454 = vmatpush1.msra.mxu0 0.0
        %455 = vmatprep.subr.mxu0 0.0
        %456 = vmatpush1.msra.mxu0 0.0
        %457 = vmatprep.subr.mxu0 0.0
        %458 = vmatpush1.msra.mxu0 0.0
        %459 = vmatprep.subr.mxu0 0.0
        %460 = vmatpush1.msra.mxu0 0.0
        %461 = vmatprep.subr.mxu0 0.0
        %462 = vmatpush1.msra.mxu0 0.0
        %463 = vmatprep.subr.mxu0 0.0
        %464 = vmatpush1.msra.mxu0 0.0
        %465 = vmatprep.subr.mxu0 0.0
        %466 = vmatpush1.msra.mxu0 0.0
        %467 = vmatprep.subr.mxu0 0.0
        %468 = vmatpush1.msra.mxu0 0.0
        %469 = vmatprep.subr.mxu0 0.0
        %470 = vmatpush1.msra.mxu0 0.0
        %471 = vmatprep.subr.mxu0 0.0
        %472 = vmatpush1.msra.mxu0 0.0
        %473 = vmatprep.subr.mxu0 0.0
        %474 = vmatpush1.msra.mxu0 0.0
        %475 = vmatprep.subr.mxu0 0.0
        %476 = vmatpush1.msra.mxu0 0.0
        %477 = vmatprep.subr.mxu0 0.0
        %478 = vmatpush1.msra.mxu0 0.0
        %479 = vmatprep.subr.mxu0 0.0
        %480 = vmatpush1.msra.mxu0 0.0
        %481 = vmatprep.subr.mxu0 0.0
        %482 = vmatpush1.msra.mxu0 0.0
        %483 = vmatprep.subr.mxu0 0.0
        %484 = vmatpush1.msra.mxu0 0.0
        %485 = vmatprep.subr.mxu0 0.0
        %486 = vmatpush1.msra.mxu0 0.0
        %487 = vmatprep.subr.mxu0 0.0
        %488 = vmatpush1.msra.mxu0 0.0
        %489 = vmatprep.mubr.f32.mxu0 0.0
        %v490 = vand.u32 %v324, 4294901760
        %491 = vmatmul.mubr.f32.gmra.mrb[0].mxu0 %v490
        %v492 = vpop.f32.mrb[0].mxu0
        %v493 = vadd.f32 %v402, %v492
        %v494 = vpop.f32.mrb[0].mxu0
        %495 = vdwg.mxu0
        %496 = vmatprep.subr.mxu0 0.0
        %v497 = vand.u32 %v318, 4294901760
        %v498 = vsub.f32 %v318, %v497
        %499 = vmatpush1.msra.mxu0 %v498
        %500 = vmatprep.subr.mxu0 0.0
        %v501 = vand.u32 %v319, 4294901760
        %v502 = vsub.f32 %v319, %v501
        %503 = vmatpush1.msra.mxu0 %v502
        %504 = vmatprep.subr.mxu0 0.0
        %v505 = vand.u32 %v320, 4294901760
        %v506 = vsub.f32 %v320, %v505
        %507 = vmatpush1.msra.mxu0 %v506
        %508 = vmatprep.subr.mxu0 0.0
        %v509 = vand.u32 %v321, 4294901760
        %v510 = vsub.f32 %v321, %v509
        %511 = vmatpush1.msra.mxu0 %v510
        %512 = vmatprep.subr.mxu0 0.0
        %513 = vmatpush1.msra.mxu0 0.0
        %514 = vmatprep.subr.mxu0 0.0
        %515 = vmatpush1.msra.mxu0 0.0
        %516 = vmatprep.subr.mxu0 0.0
        %517 = vmatpush1.msra.mxu0 0.0
        %518 = vmatprep.subr.mxu0 0.0
        %519 = vmatpush1.msra.mxu0 0.0
        %520 = vmatprep.subr.mxu0 0.0
        %521 = vmatpush1.msra.mxu0 0.0
        %522 = vmatprep.subr.mxu0 0.0
        %523 = vmatpush1.msra.mxu0 0.0
        %524 = vmatprep.subr.mxu0 0.0
        %525 = vmatpush1.msra.mxu0 0.0
        %526 = vmatprep.subr.mxu0 0.0
        %527 = vmatpush1.msra.mxu0 0.0
        %528 = vmatprep.subr.mxu0 0.0
        %529 = vmatpush1.msra.mxu0 0.0
        %530 = vmatprep.subr.mxu0 0.0
        %531 = vmatpush1.msra.mxu0 0.0
        %532 = vmatprep.subr.mxu0 0.0
        %533 = vmatpush1.msra.mxu0 0.0
        %534 = vmatprep.subr.mxu0 0.0
        %535 = vmatpush1.msra.mxu0 0.0
        %536 = vmatprep.subr.mxu0 0.0
        %537 = vmatpush1.msra.mxu0 0.0
        %538 = vmatprep.subr.mxu0 0.0
        %539 = vmatpush1.msra.mxu0 0.0
        %540 = vmatprep.subr.mxu0 0.0
        %541 = vmatpush1.msra.mxu0 0.0
        %542 = vmatprep.subr.mxu0 0.0
        %543 = vmatpush1.msra.mxu0 0.0
        %544 = vmatprep.subr.mxu0 0.0
        %545 = vmatpush1.msra.mxu0 0.0
        %546 = vmatprep.subr.mxu0 0.0
        %547 = vmatpush1.msra.mxu0 0.0
        %548 = vmatprep.subr.mxu0 0.0
        %549 = vmatpush1.msra.mxu0 0.0
        %550 = vmatprep.subr.mxu0 0.0
        %551 = vmatpush1.msra.mxu0 0.0
        %552 = vmatprep.subr.mxu0 0.0
        %553 = vmatpush1.msra.mxu0 0.0
        %554 = vmatprep.subr.mxu0 0.0
        %555 = vmatpush1.msra.mxu0 0.0
        %556 = vmatprep.subr.mxu0 0.0
        %557 = vmatpush1.msra.mxu0 0.0
        %558 = vmatprep.subr.mxu0 0.0
        %559 = vmatpush1.msra.mxu0 0.0
        %560 = vmatprep.subr.mxu0 0.0
        %561 = vmatpush1.msra.mxu0 0.0
        %562 = vmatprep.subr.mxu0 0.0
        %563 = vmatpush1.msra.mxu0 0.0
        %564 = vmatprep.subr.mxu0 0.0
        %565 = vmatpush1.msra.mxu0 0.0
        %566 = vmatprep.subr.mxu0 0.0
        %567 = vmatpush1.msra.mxu0 0.0
        %568 = vmatprep.mubr.f32.mxu0 0.0
        %v569 = vand.u32 %v324, 4294901760
        %v570 = vsub.f32 %v324, %v569
        %571 = vmatmul.mubr.f32.gmra.mrb[0].mxu0 %v570
        %v572 = vpop.f32.mrb[0].mxu0
        %v573 = vadd.f32 %v493, %v572
        %v574 = vpop.f32.mrb[0].mxu0
        %575 = vdwg.mxu0
        %576 = vmatprep.subr.mxu0 0.0
        %v577 = vand.u32 %v318, 4294901760
        %578 = vmatpush1.msra.mxu0 %v577
        %579 = vmatprep.subr.mxu0 0.0
        %v580 = vand.u32 %v319, 4294901760
        %581 = vmatpush1.msra.mxu0 %v580
        %582 = vmatprep.subr.mxu0 0.0
        %v583 = vand.u32 %v320, 4294901760
        %584 = vmatpush1.msra.mxu0 %v583
        %585 = vmatprep.subr.mxu0 0.0
        %v586 = vand.u32 %v321, 4294901760
        %587 = vmatpush1.msra.mxu0 %v586
        %588 = vmatprep.subr.mxu0 0.0
        %589 = vmatpush1.msra.mxu0 0.0
        %590 = vmatprep.subr.mxu0 0.0
        %591 = vmatpush1.msra.mxu0 0.0
        %592 = vmatprep.subr.mxu0 0.0
        %593 = vmatpush1.msra.mxu0 0.0
        %594 = vmatprep.subr.mxu0 0.0
        %595 = vmatpush1.msra.mxu0 0.0
        %596 = vmatprep.subr.mxu0 0.0
        %597 = vmatpush1.msra.mxu0 0.0
        %598 = vmatprep.subr.mxu0 0.0
        %599 = vmatpush1.msra.mxu0 0.0
        %600 = vmatprep.subr.mxu0 0.0
        %601 = vmatpush1.msra.mxu0 0.0
        %602 = vmatprep.subr.mxu0 0.0
        %603 = vmatpush1.msra.mxu0 0.0
        %604 = vmatprep.subr.mxu0 0.0
        %605 = vmatpush1.msra.mxu0 0.0
        %606 = vmatprep.subr.mxu0 0.0
        %607 = vmatpush1.msra.mxu0 0.0
        %608 = vmatprep.subr.mxu0 0.0
        %609 = vmatpush1.msra.mxu0 0.0
        %610 = vmatprep.subr.mxu0 0.0
        %611 = vmatpush1.msra.mxu0 0.0
        %612 = vmatprep.subr.mxu0 0.0
        %613 = vmatpush1.msra.mxu0 0.0
        %614 = vmatprep.subr.mxu0 0.0
        %615 = vmatpush1.msra.mxu0 0.0
        %616 = vmatprep.subr.mxu0 0.0
        %617 = vmatpush1.msra.mxu0 0.0
        %618 = vmatprep.subr.mxu0 0.0
        %619 = vmatpush1.msra.mxu0 0.0
        %620 = vmatprep.subr.mxu0 0.0
        %621 = vmatpush1.msra.mxu0 0.0
        %622 = vmatprep.subr.mxu0 0.0
        %623 = vmatpush1.msra.mxu0 0.0
        %624 = vmatprep.subr.mxu0 0.0
        %625 = vmatpush1.msra.mxu0 0.0
        %626 = vmatprep.subr.mxu0 0.0
        %627 = vmatpush1.msra.mxu0 0.0
        %628 = vmatprep.subr.mxu0 0.0
        %629 = vmatpush1.msra.mxu0 0.0
        %630 = vmatprep.subr.mxu0 0.0
        %631 = vmatpush1.msra.mxu0 0.0
        %632 = vmatprep.subr.mxu0 0.0
        %633 = vmatpush1.msra.mxu0 0.0
        %634 = vmatprep.subr.mxu0 0.0
        %635 = vmatpush1.msra.mxu0 0.0
        %636 = vmatprep.subr.mxu0 0.0
        %637 = vmatpush1.msra.mxu0 0.0
        %638 = vmatprep.subr.mxu0 0.0
        %639 = vmatpush1.msra.mxu0 0.0
        %640 = vmatprep.subr.mxu0 0.0
        %641 = vmatpush1.msra.mxu0 0.0
        %642 = vmatprep.subr.mxu0 0.0
        %643 = vmatpush1.msra.mxu0 0.0
        %644 = vmatprep.mubr.f32.mxu0 0.0
        %v645 = vand.u32 %v324, 4294901760
        %v646 = vsub.f32 %v324, %v645
        %v647 = vand.u32 %v646, 4294901760
        %648 = vmatmul.mubr.f32.gmra.mrb[0].mxu0 %v647
        %v649 = vpop.f32.mrb[0].mxu0
        %v650 = vadd.f32 %v573, %v649
        %v651 = vpop.f32.mrb[0].mxu0
        %652 = vdwg.mxu0
        %653 = vmatprep.subr.mxu0 0.0
        %v654 = vand.u32 %v318, 4294901760
        %v655 = vsub.f32 %v318, %v654
        %v656 = vand.u32 %v655, 4294901760
        %657 = vmatpush1.msra.mxu0 %v656
        %658 = vmatprep.subr.mxu0 0.0
        %v659 = vand.u32 %v319, 4294901760
        %v660 = vsub.f32 %v319, %v659
        %v661 = vand.u32 %v660, 4294901760
        %662 = vmatpush1.msra.mxu0 %v661
        %663 = vmatprep.subr.mxu0 0.0
        %v664 = vand.u32 %v320, 4294901760
        %v665 = vsub.f32 %v320, %v664
        %v666 = vand.u32 %v665, 4294901760
        %667 = vmatpush1.msra.mxu0 %v666
        %668 = vmatprep.subr.mxu0 0.0
        %v669 = vand.u32 %v321, 4294901760
        %v670 = vsub.f32 %v321, %v669
        %v671 = vand.u32 %v670, 4294901760
        %672 = vmatpush1.msra.mxu0 %v671
        %673 = vmatprep.subr.mxu0 0.0
        %674 = vmatpush1.msra.mxu0 0.0
        %675 = vmatprep.subr.mxu0 0.0
        %676 = vmatpush1.msra.mxu0 0.0
        %677 = vmatprep.subr.mxu0 0.0
        %678 = vmatpush1.msra.mxu0 0.0
        %679 = vmatprep.subr.mxu0 0.0
        %680 = vmatpush1.msra.mxu0 0.0
        %681 = vmatprep.subr.mxu0 0.0
        %682 = vmatpush1.msra.mxu0 0.0
        %683 = vmatprep.subr.mxu0 0.0
        %684 = vmatpush1.msra.mxu0 0.0
        %685 = vmatprep.subr.mxu0 0.0
        %686 = vmatpush1.msra.mxu0 0.0
        %687 = vmatprep.subr.mxu0 0.0
        %688 = vmatpush1.msra.mxu0 0.0
        %689 = vmatprep.subr.mxu0 0.0
        %690 = vmatpush1.msra.mxu0 0.0
        %691 = vmatprep.subr.mxu0 0.0
        %692 = vmatpush1.msra.mxu0 0.0
        %693 = vmatprep.subr.mxu0 0.0
        %694 = vmatpush1.msra.mxu0 0.0
        %695 = vmatprep.subr.mxu0 0.0
        %696 = vmatpush1.msra.mxu0 0.0
        %697 = vmatprep.subr.mxu0 0.0
        %698 = vmatpush1.msra.mxu0 0.0
        %699 = vmatprep.subr.mxu0 0.0
        %700 = vmatpush1.msra.mxu0 0.0
        %701 = vmatprep.subr.mxu0 0.0
        %702 = vmatpush1.msra.mxu0 0.0
        %703 = vmatprep.subr.mxu0 0.0
        %704 = vmatpush1.msra.mxu0 0.0
        %705 = vmatprep.subr.mxu0 0.0
        %706 = vmatpush1.msra.mxu0 0.0
        %707 = vmatprep.subr.mxu0 0.0
        %708 = vmatpush1.msra.mxu0 0.0
        %709 = vmatprep.subr.mxu0 0.0
        %710 = vmatpush1.msra.mxu0 0.0
        %711 = vmatprep.subr.mxu0 0.0
        %712 = vmatpush1.msra.mxu0 0.0
        %713 = vmatprep.subr.mxu0 0.0
        %714 = vmatpush1.msra.mxu0 0.0
        %715 = vmatprep.subr.mxu0 0.0
        %716 = vmatpush1.msra.mxu0 0.0
        %717 = vmatprep.subr.mxu0 0.0
        %718 = vmatpush1.msra.mxu0 0.0
        %719 = vmatprep.subr.mxu0 0.0
        %720 = vmatpush1.msra.mxu0 0.0
        %721 = vmatprep.subr.mxu0 0.0
        %722 = vmatpush1.msra.mxu0 0.0
        %723 = vmatprep.subr.mxu0 0.0
        %724 = vmatpush1.msra.mxu0 0.0
        %725 = vmatprep.subr.mxu0 0.0
        %726 = vmatpush1.msra.mxu0 0.0
        %727 = vmatprep.subr.mxu0 0.0
        %728 = vmatpush1.msra.mxu0 0.0
        %729 = vmatprep.mubr.f32.mxu0 0.0
        %v730 = vand.u32 %v324, 4294901760
        %731 = vmatmul.mubr.f32.gmra.mrb[0].mxu0 %v730
        %v732 = vpop.f32.mrb[0].mxu0
        %v733 = vadd.f32 %v650, %v732
        %v734 = vpop.f32.mrb[0].mxu0
        %735 = vdwg.mxu0
        %736 = vmatprep.subr.mxu0 0.0
        %v737 = vand.u32 %v318, 4294901760
        %738 = vmatpush1.msra.mxu0 %v737
        %739 = vmatprep.subr.mxu0 0.0
        %v740 = vand.u32 %v319, 4294901760
        %741 = vmatpush1.msra.mxu0 %v740
        %742 = vmatprep.subr.mxu0 0.0
        %v743 = vand.u32 %v320, 4294901760
        %744 = vmatpush1.msra.mxu0 %v743
        %745 = vmatprep.subr.mxu0 0.0
        %v746 = vand.u32 %v321, 4294901760
        %747 = vmatpush1.msra.mxu0 %v746
        %748 = vmatprep.subr.mxu0 0.0
        %749 = vmatpush1.msra.mxu0 0.0
        %750 = vmatprep.subr.mxu0 0.0
        %751 = vmatpush1.msra.mxu0 0.0
        %752 = vmatprep.subr.mxu0 0.0
        %753 = vmatpush1.msra.mxu0 0.0
        %754 = vmatprep.subr.mxu0 0.0
        %755 = vmatpush1.msra.mxu0 0.0
        %756 = vmatprep.subr.mxu0 0.0
        %757 = vmatpush1.msra.mxu0 0.0
        %758 = vmatprep.subr.mxu0 0.0
        %759 = vmatpush1.msra.mxu0 0.0
        %760 = vmatprep.subr.mxu0 0.0
        %761 = vmatpush1.msra.mxu0 0.0
        %762 = vmatprep.subr.mxu0 0.0
        %763 = vmatpush1.msra.mxu0 0.0
        %764 = vmatprep.subr.mxu0 0.0
        %765 = vmatpush1.msra.mxu0 0.0
        %766 = vmatprep.subr.mxu0 0.0
        %767 = vmatpush1.msra.mxu0 0.0
        %768 = vmatprep.subr.mxu0 0.0
        %769 = vmatpush1.msra.mxu0 0.0
        %770 = vmatprep.subr.mxu0 0.0
        %771 = vmatpush1.msra.mxu0 0.0
        %772 = vmatprep.subr.mxu0 0.0
        %773 = vmatpush1.msra.mxu0 0.0
        %774 = vmatprep.subr.mxu0 0.0
        %775 = vmatpush1.msra.mxu0 0.0
        %776 = vmatprep.subr.mxu0 0.0
        %777 = vmatpush1.msra.mxu0 0.0
        %778 = vmatprep.subr.mxu0 0.0
        %779 = vmatpush1.msra.mxu0 0.0
        %780 = vmatprep.subr.mxu0 0.0
        %781 = vmatpush1.msra.mxu0 0.0
        %782 = vmatprep.subr.mxu0 0.0
        %783 = vmatpush1.msra.mxu0 0.0
        %784 = vmatprep.subr.mxu0 0.0
        %785 = vmatpush1.msra.mxu0 0.0
        %786 = vmatprep.subr.mxu0 0.0
        %787 = vmatpush1.msra.mxu0 0.0
        %788 = vmatprep.subr.mxu0 0.0
        %789 = vmatpush1.msra.mxu0 0.0
        %790 = vmatprep.subr.mxu0 0.0
        %791 = vmatpush1.msra.mxu0 0.0
        %792 = vmatprep.subr.mxu0 0.0
        %793 = vmatpush1.msra.mxu0 0.0
        %794 = vmatprep.subr.mxu0 0.0
        %795 = vmatpush1.msra.mxu0 0.0
        %796 = vmatprep.subr.mxu0 0.0
        %797 = vmatpush1.msra.mxu0 0.0
        %798 = vmatprep.subr.mxu0 0.0
        %799 = vmatpush1.msra.mxu0 0.0
        %800 = vmatprep.subr.mxu0 0.0
        %801 = vmatpush1.msra.mxu0 0.0
        %802 = vmatprep.subr.mxu0 0.0
        %803 = vmatpush1.msra.mxu0 0.0
        %804 = vmatprep.mubr.f32.mxu0 0.0
        %v805 = vand.u32 %v324, 4294901760
        %806 = vmatmul.mubr.f32.gmra.mrb[0].mxu0 %v805
        %v807 = vpop.f32.mrb[0].mxu0
        %v808 = vadd.f32 %v733, %v807
        %v809 = vpop.f32.mrb[0].mxu0
        %810 = vdwg.mxu0
        %v811 = vsel %vm316, 16843009, 0
        %v812 = vunpack.c.0.s8 %v811
        %vm813 = vcmp.ne.s32.totalorder %v812, 0
        %v814 = vsel %vm813, %v808, -1000.0
        %v815 = vld [vmem:[%s308] sm:$0xff]
        %817 = vset.pattern.permute.xlu0 0
        %818 = vperm.xlu0 %817, %v815
        %v819 = vpop.permute.xlu0 %818
        %v821 = vsub.f32 %v814, %v819
        %v822 = vmul.f32 %v821, 1.442695
        %v823 = vpow.pop %v822
        %v824 = vld [vmem:[%s312] sm:$0xff]
        %826 = vset.pattern.permute.xlu0 0
        %827 = vperm.xlu0 %826, %v824
        %v828 = vpop.permute.xlu0 %827
        %v830 = vmul.f32 %v823, %v828
        %vm831 = vcmask 130048
        %832 = vst.msk [vmem:[%s289] sm:$0xff] %vm831, %v830
        %s833 = sand.u32 %s173, 1
        %s834 = scalar_lea.sflag [#allocation3], %s833
        %s835 = sand.u32 %s173, 1
        %s836 = smul.addr %s835, 8
        %s837 = scalar_lea.vmem [#allocation2], %s836
        // Predicated region
        $region41: #{inner_product_decoder.3} parent=39 // pred_check
          %p838 = pneg %p183
        $region42: #{inner_product_decoder.3} parent=39 // pred_check_branch
          %840 = sbr.rel (%p838) target = $region44
        $region43: #{inner_product_decoder.3} parent=39 // pred_region
          %s842 = ssub.s32 128, 128
          %843 = vsyncadd %s834, %s842
          %s844 = sadd.s32 %s24, %s23
          %s845 = smul.addr %s844, 128
          %s846 = scalar_lea.hbm %s5, %s845
          %s848 = sshll.u32 %s837, 4
          %s849 = int_to_ptr.vmem [resolvable:$true] %s848
          %851 = dma.vmem_to_hbm [thread:$0]  %s849, 128, %s846, %s834
        $region44: #{inner_product_decoder.3} parent=39 // pred_fallthru
          _
      $region40: #{inner_product_decoder.3} parent=5 // pred_fallthru
        _
      %p852 = scmp.le.s32.totalorder 2, %s14
      // Predicated region
      $region45: #{inner_product_decoder.3} parent=5 // pred_check
        %p853 = pneg %p852
      $region46: #{inner_product_decoder.3} parent=5 // pred_check_branch
        %855 = sbr.rel (%p853) target = $region48
      $region47: #{inner_product_decoder.3} parent=5 // pred_region
        %s856 = ssub.s32 %s14, 2
        // Predicated region
        $region49: #{inner_product_decoder.3} parent=47 // pred_check
          %p857 = pneg %p189
        $region50: #{inner_product_decoder.3} parent=47 // pred_check_branch
          %859 = sbr.rel (%p857) target = $region52
        $region51: #{inner_product_decoder.3} parent=47 // pred_region
          %s860 = sand.u32 %s174, 1
          %s861 = scalar_lea.sflag [#allocation3], %s860
          %s862 = sand.u32 %s174, 1
          %s863 = smul.addr %s862, 8
          %s864 = scalar_lea.vmem [#allocation2], %s863
          %865 = dma.done %s861, 128
        $region52: #{inner_product_decoder.3} parent=47 // pred_fallthru
          _
      $region48: #{inner_product_decoder.3} parent=5 // pred_fallthru
        _
    $region6: #{inner_product_decoder.3} parent=1 // loop_footer
      %s18 = sadd.s32 1, %s14
    $region7: #{inner_product_decoder.3} parent=1 // loop_footer_branch
      %13 = sbr.rel target = $region3
    $region8: #{inner_product_decoder.3} parent=1 // loop_exit
      _
    %866 = vsyncpa [#allocation3], 1
    %s867 = scalar_lea.sflag [#allocation3], 1
    %868 = vsyncpa %s867, 1

</llo_original>
